<compile_context>
chip_gen: v5e
topology: v5e:2x2
jax: 0.10.0
libtpu: 0.0.40
codegen_flags: <defaults>
</compile_context>

<pallas_src>
import jax
import jax.numpy as jnp
from jax.experimental import pallas as pl
from jax.experimental.pallas import tpu as pltpu

EPS = 1e-5
LEAKY_SLOPE = 1.0  # nn.LeakyReLU(True) -> negative_slope == True == 1.0

DIMS = [2, 8, 16, 25, 50, 300]
HPAD = 128     # padded width of every hidden activation (lane-dense)
OPAD = 384     # padded width of the 300-wide output (3 * 128)

# ---- packed slab layout -----------------------------------------------------
# Slab A, shape (400, 128):
#   rows   0..7   : W1 block  (valid [0:2 , 0:8 ])
#   rows   8..135 : W2 block  (valid [0:8 , 0:16])  (K padded to 128)
#   rows 136..263 : W3 block  (valid [0:16, 0:25])
#   rows 264..391 : W4 block  (valid [0:25, 0:50])
#   rows 392..399 : g1, be1, g2, be2, g3, be3, g4, be4  (one row each)
W1_ROW, W2_ROW, W3_ROW, W4_ROW, VEC_ROW, A_ROWS = 0, 8, 136, 264, 392, 400
# Slab B, shape (136, 384):
#   rows   0..127 : W5 block  (valid [0:50, 0:300])
#   row       128 : b5        (valid [0:300])
W5_ROW, B5_ROW, B_ROWS = 0, 128, 136


def decoder_kernel(x_ref, wa_ref, wb_ref, o_ref):
    inv_n = 1.0 / x_ref.shape[0]  # static batch size

    def bn(h, vec_row):
        # Fused training-mode BatchNorm: one-pass stats + single scale/shift.
        gamma = wa_ref[VEC_ROW + vec_row : VEC_ROW + vec_row + 1, :]
        beta = wa_ref[VEC_ROW + vec_row + 1 : VEC_ROW + vec_row + 2, :]
        s1 = jnp.sum(h, axis=0, keepdims=True)
        s2 = jnp.sum(h * h, axis=0, keepdims=True)
        mean = s1 * inv_n
        var = jnp.maximum(s2 * inv_n - mean * mean, 0.0)  # clamp: cancellation
        scale = jax.lax.rsqrt(var + EPS) * gamma          # 0 in padded lanes
        shift = beta - mean * scale                       # 0 in padded lanes
        return h * scale + shift

    def mxu(h, w):
        return jnp.dot(h, w, preferred_element_type=jnp.float32,
                       precision=jax.lax.Precision.HIGHEST)

    x = x_ref[...].astype(jnp.float32)                    # (B, 2)

    # Layer 1 (K=2): VPU broadcast multiply-adds, no MXU round trip.
    h = x[:, 0:1] * wa_ref[W1_ROW:W1_ROW + 1, :] \
        + x[:, 1:2] * wa_ref[W1_ROW + 1:W1_ROW + 2, :]    # (B, 128)
    h = bn(h, 0)

    h = bn(mxu(h, wa_ref[W2_ROW:W2_ROW + 128, :]), 2)
    h = bn(mxu(h, wa_ref[W3_ROW:W3_ROW + 128, :]), 4)
    h = bn(mxu(h, wa_ref[W4_ROW:W4_ROW + 128, :]), 6)

    h = mxu(h, wb_ref[W5_ROW:W5_ROW + 128, :]) + wb_ref[B5_ROW:B5_ROW + 1, :]
    o_ref[...] = jax.nn.sigmoid(h).astype(o_ref.dtype)    # (B, 384)


def decoder_forward(x, packed):
    """x: (B, 2) float32 -> (B, 300) float32.

    The whole batch is one block (exact BN batch stats). Activations cost only
    a few KB/row of VMEM, so B in the thousands still fits on every generation
    (cap roughly half as large on v7x's 64 MiB VMEM)."""
    wa, wb = packed
    B = x.shape[0]
    vmem = lambda: pl.BlockSpec(memory_space=pltpu.MemorySpace.VMEM)
    out = pl.pallas_call(
        decoder_kernel,
        grid=(),
        in_specs=[vmem(), vmem(), vmem()],
        out_specs=vmem(),
        out_shape=jax.ShapeDtypeStruct((B, OPAD), jnp.float32),
    )(x, wa, wb)
    return out[:, :DIMS[-1]]


def init_params(key):
    """PyTorch-default-style init. Linear W stored transposed as (in, out),
    biases as (1, out); BatchNorm gamma=1, beta=0 as (1, F)."""
    params = []
    keys = jax.random.split(key, 2 * (len(DIMS) - 1))
    for li in range(len(DIMS) - 1):
        fan_in, fan_out = DIMS[li], DIMS[li + 1]
        bound = 1.0 / jnp.sqrt(jnp.float32(fan_in))
        w = jax.random.uniform(keys[2 * li], (fan_in, fan_out), jnp.float32,
                               -bound, bound)
        b = jax.random.uniform(keys[2 * li + 1], (1, fan_out), jnp.float32,
                               -bound, bound)
        params += [w, b]
        if li < len(DIMS) - 2:  # BN after every layer except the last Linear
            params += [jnp.ones((1, fan_out), jnp.float32),
                       jnp.zeros((1, fan_out), jnp.float32)]
    return params


def pack_params(params):
    """Pack the 18 tiny parameter arrays into two lane-dense f32 slabs.
    b1..b4 are intentionally omitted (exactly cancelled by training-mode BN)."""
    (w1, b1, g1, be1,
     w2, b2, g2, be2,
     w3, b3, g3, be3,
     w4, b4, g4, be4,
     w5, b5) = params
    a = jnp.zeros((A_ROWS, HPAD), jnp.float32)
    a = a.at[W1_ROW:W1_ROW + 2, 0:8].set(w1)
    a = a.at[W2_ROW:W2_ROW + 8, 0:16].set(w2)
    a = a.at[W3_ROW:W3_ROW + 16, 0:25].set(w3)
    a = a.at[W4_ROW:W4_ROW + 25, 0:50].set(w4)
    for i, v in enumerate([g1, be1, g2, be2, g3, be3, g4, be4]):
        a = a.at[VEC_ROW + i:VEC_ROW + i + 1, 0:v.shape[1]].set(v)
    b = jnp.zeros((B_ROWS, OPAD), jnp.float32)
    b = b.at[W5_ROW:W5_ROW + 50, 0:300].set(w5)
    b = b.at[B5_ROW:B5_ROW + 1, 0:300].set(b5)
    return a, b


def decoder_reference(x, params):
    """Pure-JAX reference matching the PyTorch module literally."""
    (w1, b1, g1, be1, w2, b2, g2, be2, w3, b3, g3, be3,
     w4, b4, g4, be4, w5, b5) = params

    def bn(h, g, be):
        mean = jnp.mean(h, axis=0, keepdims=True)
        var = jnp.mean((h - mean) ** 2, axis=0, keepdims=True)
        return (h - mean) * jax.lax.rsqrt(var + EPS) * g + be

    def leaky(h):  # negative_slope == 1.0 -> identity, kept for fidelity
        return jnp.where(h >= 0, h, LEAKY_SLOPE * h)

    dot = lambda p, q: jnp.dot(p, q, precision=jax.lax.Precision.HIGHEST)
    h = bn(leaky(dot(x, w1) + b1), g1, be1)
    h = bn(leaky(dot(h, w2) + b2), g2, be2)
    h = bn(leaky(dot(h, w3) + b3), g3, be3)
    h = bn(leaky(dot(h, w4) + b4), g4, be4)
    return jax.nn.sigmoid(dot(h, w5) + b5)


if __name__ == "__main__":
    key = jax.random.PRNGKey(0)
    pkey, xkey = jax.random.split(key)

    params = init_params(pkey)
    packed = pack_params(params)  # done once, reused across calls

    B = 8  # BatchNorm1d in training mode needs B > 1
    x = jax.random.normal(xkey, (B, 2), jnp.float32)

    fwd = jax.jit(decoder_forward)
    out = jax.block_until_ready(fwd(x, packed))

    assert out.shape == (B, 300), out.shape
    assert out.dtype == jnp.float32

    ref = decoder_reference(x, params)
    max_err = float(jnp.max(jnp.abs(out - ref)))
    assert max_err < 2e-3, f"max abs error vs reference: {max_err}"
    assert bool(jnp.all(out >= 0.0)) and bool(jnp.all(out <= 1.0))

    print("KERNEL_OK")
</pallas_src>

<mosaic_0001>
module attributes {stable_mosaic.version = 11 : i64} {
  func.func @decoder_kernel(%arg0: memref<8x2xf32, #tpu.memory_space<vmem>>, %arg1: memref<400x128xf32, #tpu.memory_space<vmem>>, %arg2: memref<136x384xf32, #tpu.memory_space<vmem>>, %arg3: memref<8x384xf32, #tpu.memory_space<vmem>>) attributes {dimension_semantics = [], scalar_prefetch = 0 : i64, scratch_operands = 0 : i64, tpu.core_type = #tpu.core_type<tc>} {
    %c0 = arith.constant 0 : index
    %c0_0 = arith.constant 0 : index
    %0 = vector.load %arg0[%c0, %c0_0] : memref<8x2xf32, #tpu.memory_space<vmem>>, vector<8x2xf32>
    %1 = vector.extract_strided_slice %0 {offsets = [0, 0], sizes = [8, 1], strides = [1, 1]} : vector<8x2xf32> to vector<8x1xf32>
    %c0_1 = arith.constant 0 : index
    %c0_2 = arith.constant 0 : index
    %2 = vector.load %arg1[%c0_1, %c0_2] : memref<400x128xf32, #tpu.memory_space<vmem>>, vector<1x128xf32>
    %3 = vector.broadcast %1 : vector<8x1xf32> to vector<8x128xf32>
    %4 = vector.broadcast %2 : vector<1x128xf32> to vector<8x128xf32>
    %5 = arith.mulf %3, %4 : vector<8x128xf32>
    %6 = vector.extract_strided_slice %0 {offsets = [0, 1], sizes = [8, 1], strides = [1, 1]} : vector<8x2xf32> to vector<8x1xf32>
    %c1 = arith.constant 1 : index
    %c0_3 = arith.constant 0 : index
    %7 = vector.load %arg1[%c1, %c0_3] : memref<400x128xf32, #tpu.memory_space<vmem>>, vector<1x128xf32>
    %8 = vector.broadcast %6 : vector<8x1xf32> to vector<8x128xf32>
    %9 = vector.broadcast %7 : vector<1x128xf32> to vector<8x128xf32>
    %10 = arith.mulf %8, %9 : vector<8x128xf32>
    %11 = arith.addf %5, %10 : vector<8x128xf32>
    %c392 = arith.constant 392 : index
    %c0_4 = arith.constant 0 : index
    %12 = vector.load %arg1[%c392, %c0_4] : memref<400x128xf32, #tpu.memory_space<vmem>>, vector<1x128xf32>
    %c393 = arith.constant 393 : index
    %c0_5 = arith.constant 0 : index
    %13 = vector.load %arg1[%c393, %c0_5] : memref<400x128xf32, #tpu.memory_space<vmem>>, vector<1x128xf32>
    %cst = arith.constant dense<0.000000e+00> : vector<128xf32>
    %14 = vector.multi_reduction <add>, %11, %cst [0] : vector<8x128xf32> to vector<128xf32>
    %15 = vector.shape_cast %14 : vector<128xf32> to vector<1x128xf32>
    %16 = arith.mulf %11, %11 : vector<8x128xf32>
    %cst_6 = arith.constant dense<0.000000e+00> : vector<128xf32>
    %17 = vector.multi_reduction <add>, %16, %cst_6 [0] : vector<8x128xf32> to vector<128xf32>
    %18 = vector.shape_cast %17 : vector<128xf32> to vector<1x128xf32>
    %cst_7 = arith.constant 1.250000e-01 : f32
    %19 = vector.broadcast %cst_7 : f32 to vector<1x128xf32>
    %20 = arith.mulf %15, %19 : vector<1x128xf32>
    %cst_8 = arith.constant 1.250000e-01 : f32
    %21 = vector.broadcast %cst_8 : f32 to vector<1x128xf32>
    %22 = arith.mulf %18, %21 : vector<1x128xf32>
    %23 = arith.mulf %20, %20 : vector<1x128xf32>
    %24 = arith.subf %22, %23 : vector<1x128xf32>
    %cst_9 = arith.constant 0.000000e+00 : f32
    %25 = vector.broadcast %cst_9 : f32 to vector<1x128xf32>
    %26 = arith.maximumf %24, %25 : vector<1x128xf32>
    %cst_10 = arith.constant 9.99999974E-6 : f32
    %27 = vector.broadcast %cst_10 : f32 to vector<1x128xf32>
    %28 = arith.addf %26, %27 : vector<1x128xf32>
    %29 = math.rsqrt %28 : vector<1x128xf32>
    %30 = arith.mulf %29, %12 : vector<1x128xf32>
    %31 = arith.mulf %20, %30 : vector<1x128xf32>
    %32 = arith.subf %13, %31 : vector<1x128xf32>
    %33 = vector.broadcast %30 : vector<1x128xf32> to vector<8x128xf32>
    %34 = arith.mulf %11, %33 : vector<8x128xf32>
    %35 = vector.broadcast %32 : vector<1x128xf32> to vector<8x128xf32>
    %36 = arith.addf %34, %35 : vector<8x128xf32>
    %c8 = arith.constant 8 : index
    %c0_11 = arith.constant 0 : index
    %37 = vector.load %arg1[%c8, %c0_11] : memref<400x128xf32, #tpu.memory_space<vmem>>, vector<128x128xf32>
    %cst_12 = arith.constant dense<0.000000e+00> : vector<8x128xf32>
    %38 = tpu.matmul %36, %37, %cst_12 {dimension_numbers = #tpu.dot_dimension_numbers<[1], [0], [0], [1], [0, 0, 1, 1], [], []>, precision = #tpu.contract_precision<fp32>} : vector<8x128xf32>, vector<128x128xf32>, vector<8x128xf32> -> vector<8x128xf32>
    %c394 = arith.constant 394 : index
    %c0_13 = arith.constant 0 : index
    %39 = vector.load %arg1[%c394, %c0_13] : memref<400x128xf32, #tpu.memory_space<vmem>>, vector<1x128xf32>
    %c395 = arith.constant 395 : index
    %c0_14 = arith.constant 0 : index
    %40 = vector.load %arg1[%c395, %c0_14] : memref<400x128xf32, #tpu.memory_space<vmem>>, vector<1x128xf32>
    %cst_15 = arith.constant dense<0.000000e+00> : vector<128xf32>
    %41 = vector.multi_reduction <add>, %38, %cst_15 [0] : vector<8x128xf32> to vector<128xf32>
    %42 = vector.shape_cast %41 : vector<128xf32> to vector<1x128xf32>
    %43 = arith.mulf %38, %38 : vector<8x128xf32>
    %cst_16 = arith.constant dense<0.000000e+00> : vector<128xf32>
    %44 = vector.multi_reduction <add>, %43, %cst_16 [0] : vector<8x128xf32> to vector<128xf32>
    %45 = vector.shape_cast %44 : vector<128xf32> to vector<1x128xf32>
    %cst_17 = arith.constant 1.250000e-01 : f32
    %46 = vector.broadcast %cst_17 : f32 to vector<1x128xf32>
    %47 = arith.mulf %42, %46 : vector<1x128xf32>
    %cst_18 = arith.constant 1.250000e-01 : f32
    %48 = vector.broadcast %cst_18 : f32 to vector<1x128xf32>
    %49 = arith.mulf %45, %48 : vector<1x128xf32>
    %50 = arith.mulf %47, %47 : vector<1x128xf32>
    %51 = arith.subf %49, %50 : vector<1x128xf32>
    %cst_19 = arith.constant 0.000000e+00 : f32
    %52 = vector.broadcast %cst_19 : f32 to vector<1x128xf32>
    %53 = arith.maximumf %51, %52 : vector<1x128xf32>
    %cst_20 = arith.constant 9.99999974E-6 : f32
    %54 = vector.broadcast %cst_20 : f32 to vector<1x128xf32>
    %55 = arith.addf %53, %54 : vector<1x128xf32>
    %56 = math.rsqrt %55 : vector<1x128xf32>
    %57 = arith.mulf %56, %39 : vector<1x128xf32>
    %58 = arith.mulf %47, %57 : vector<1x128xf32>
    %59 = arith.subf %40, %58 : vector<1x128xf32>
    %60 = vector.broadcast %57 : vector<1x128xf32> to vector<8x128xf32>
    %61 = arith.mulf %38, %60 : vector<8x128xf32>
    %62 = vector.broadcast %59 : vector<1x128xf32> to vector<8x128xf32>
    %63 = arith.addf %61, %62 : vector<8x128xf32>
    %c136 = arith.constant 136 : index
    %c0_21 = arith.constant 0 : index
    %64 = vector.load %arg1[%c136, %c0_21] : memref<400x128xf32, #tpu.memory_space<vmem>>, vector<128x128xf32>
    %cst_22 = arith.constant dense<0.000000e+00> : vector<8x128xf32>
    %65 = tpu.matmul %63, %64, %cst_22 {dimension_numbers = #tpu.dot_dimension_numbers<[1], [0], [0], [1], [0, 0, 1, 1], [], []>, precision = #tpu.contract_precision<fp32>} : vector<8x128xf32>, vector<128x128xf32>, vector<8x128xf32> -> vector<8x128xf32>
    %c396 = arith.constant 396 : index
    %c0_23 = arith.constant 0 : index
    %66 = vector.load %arg1[%c396, %c0_23] : memref<400x128xf32, #tpu.memory_space<vmem>>, vector<1x128xf32>
    %c397 = arith.constant 397 : index
    %c0_24 = arith.constant 0 : index
    %67 = vector.load %arg1[%c397, %c0_24] : memref<400x128xf32, #tpu.memory_space<vmem>>, vector<1x128xf32>
    %cst_25 = arith.constant dense<0.000000e+00> : vector<128xf32>
    %68 = vector.multi_reduction <add>, %65, %cst_25 [0] : vector<8x128xf32> to vector<128xf32>
    %69 = vector.shape_cast %68 : vector<128xf32> to vector<1x128xf32>
    %70 = arith.mulf %65, %65 : vector<8x128xf32>
    %cst_26 = arith.constant dense<0.000000e+00> : vector<128xf32>
    %71 = vector.multi_reduction <add>, %70, %cst_26 [0] : vector<8x128xf32> to vector<128xf32>
    %72 = vector.shape_cast %71 : vector<128xf32> to vector<1x128xf32>
    %cst_27 = arith.constant 1.250000e-01 : f32
    %73 = vector.broadcast %cst_27 : f32 to vector<1x128xf32>
    %74 = arith.mulf %69, %73 : vector<1x128xf32>
    %cst_28 = arith.constant 1.250000e-01 : f32
    %75 = vector.broadcast %cst_28 : f32 to vector<1x128xf32>
    %76 = arith.mulf %72, %75 : vector<1x128xf32>
    %77 = arith.mulf %74, %74 : vector<1x128xf32>
    %78 = arith.subf %76, %77 : vector<1x128xf32>
    %cst_29 = arith.constant 0.000000e+00 : f32
    %79 = vector.broadcast %cst_29 : f32 to vector<1x128xf32>
    %80 = arith.maximumf %78, %79 : vector<1x128xf32>
    %cst_30 = arith.constant 9.99999974E-6 : f32
    %81 = vector.broadcast %cst_30 : f32 to vector<1x128xf32>
    %82 = arith.addf %80, %81 : vector<1x128xf32>
    %83 = math.rsqrt %82 : vector<1x128xf32>
    %84 = arith.mulf %83, %66 : vector<1x128xf32>
    %85 = arith.mulf %74, %84 : vector<1x128xf32>
    %86 = arith.subf %67, %85 : vector<1x128xf32>
    %87 = vector.broadcast %84 : vector<1x128xf32> to vector<8x128xf32>
    %88 = arith.mulf %65, %87 : vector<8x128xf32>
    %89 = vector.broadcast %86 : vector<1x128xf32> to vector<8x128xf32>
    %90 = arith.addf %88, %89 : vector<8x128xf32>
    %c264 = arith.constant 264 : index
    %c0_31 = arith.constant 0 : index
    %91 = vector.load %arg1[%c264, %c0_31] : memref<400x128xf32, #tpu.memory_space<vmem>>, vector<128x128xf32>
    %cst_32 = arith.constant dense<0.000000e+00> : vector<8x128xf32>
    %92 = tpu.matmul %90, %91, %cst_32 {dimension_numbers = #tpu.dot_dimension_numbers<[1], [0], [0], [1], [0, 0, 1, 1], [], []>, precision = #tpu.contract_precision<fp32>} : vector<8x128xf32>, vector<128x128xf32>, vector<8x128xf32> -> vector<8x128xf32>
    %c398 = arith.constant 398 : index
    %c0_33 = arith.constant 0 : index
    %93 = vector.load %arg1[%c398, %c0_33] : memref<400x128xf32, #tpu.memory_space<vmem>>, vector<1x128xf32>
    %c399 = arith.constant 399 : index
    %c0_34 = arith.constant 0 : index
    %94 = vector.load %arg1[%c399, %c0_34] : memref<400x128xf32, #tpu.memory_space<vmem>>, vector<1x128xf32>
    %cst_35 = arith.constant dense<0.000000e+00> : vector<128xf32>
    %95 = vector.multi_reduction <add>, %92, %cst_35 [0] : vector<8x128xf32> to vector<128xf32>
    %96 = vector.shape_cast %95 : vector<128xf32> to vector<1x128xf32>
    %97 = arith.mulf %92, %92 : vector<8x128xf32>
    %cst_36 = arith.constant dense<0.000000e+00> : vector<128xf32>
    %98 = vector.multi_reduction <add>, %97, %cst_36 [0] : vector<8x128xf32> to vector<128xf32>
    %99 = vector.shape_cast %98 : vector<128xf32> to vector<1x128xf32>
    %cst_37 = arith.constant 1.250000e-01 : f32
    %100 = vector.broadcast %cst_37 : f32 to vector<1x128xf32>
    %101 = arith.mulf %96, %100 : vector<1x128xf32>
    %cst_38 = arith.constant 1.250000e-01 : f32
    %102 = vector.broadcast %cst_38 : f32 to vector<1x128xf32>
    %103 = arith.mulf %99, %102 : vector<1x128xf32>
    %104 = arith.mulf %101, %101 : vector<1x128xf32>
    %105 = arith.subf %103, %104 : vector<1x128xf32>
    %cst_39 = arith.constant 0.000000e+00 : f32
    %106 = vector.broadcast %cst_39 : f32 to vector<1x128xf32>
    %107 = arith.maximumf %105, %106 : vector<1x128xf32>
    %cst_40 = arith.constant 9.99999974E-6 : f32
    %108 = vector.broadcast %cst_40 : f32 to vector<1x128xf32>
    %109 = arith.addf %107, %108 : vector<1x128xf32>
    %110 = math.rsqrt %109 : vector<1x128xf32>
    %111 = arith.mulf %110, %93 : vector<1x128xf32>
    %112 = arith.mulf %101, %111 : vector<1x128xf32>
    %113 = arith.subf %94, %112 : vector<1x128xf32>
    %114 = vector.broadcast %111 : vector<1x128xf32> to vector<8x128xf32>
    %115 = arith.mulf %92, %114 : vector<8x128xf32>
    %116 = vector.broadcast %113 : vector<1x128xf32> to vector<8x128xf32>
    %117 = arith.addf %115, %116 : vector<8x128xf32>
    %c0_41 = arith.constant 0 : index
    %c0_42 = arith.constant 0 : index
    %118 = vector.load %arg2[%c0_41, %c0_42] : memref<136x384xf32, #tpu.memory_space<vmem>>, vector<128x384xf32>
    %cst_43 = arith.constant dense<0.000000e+00> : vector<8x384xf32>
    %119 = tpu.matmul %117, %118, %cst_43 {dimension_numbers = #tpu.dot_dimension_numbers<[1], [0], [0], [1], [0, 0, 1, 1], [], []>, precision = #tpu.contract_precision<fp32>} : vector<8x128xf32>, vector<128x384xf32>, vector<8x384xf32> -> vector<8x384xf32>
    %c128 = arith.constant 128 : index
    %c0_44 = arith.constant 0 : index
    %120 = vector.load %arg2[%c128, %c0_44] : memref<136x384xf32, #tpu.memory_space<vmem>>, vector<1x384xf32>
    %121 = vector.broadcast %120 : vector<1x384xf32> to vector<8x384xf32>
    %122 = arith.addf %119, %121 : vector<8x384xf32>
    %123 = arith.negf %122 : vector<8x384xf32>
    %124 = math.exp %123 : vector<8x384xf32>
    %cst_45 = arith.constant 1.000000e+00 : f32
    %125 = vector.broadcast %cst_45 : f32 to vector<8x384xf32>
    %126 = arith.addf %125, %124 : vector<8x384xf32>
    %127 = arith.divf %125, %126 : vector<8x384xf32>
    %c0_46 = arith.constant 0 : index
    %c0_47 = arith.constant 0 : index
    %128 = vector.load %arg3[%c0_46, %c0_47] : memref<8x384xf32, #tpu.memory_space<vmem>>, vector<8x384xf32>
    tpu.vector_store %arg3[%c0_46, %c0_47], %127 {strides = array<i32>} : memref<8x384xf32, #tpu.memory_space<vmem>>, vector<8x384xf32>,
    return
  }
}

</mosaic_0001>

<llo_original>
// kernel: decoder_forward.1
$region0: #{decoder_forward.1}
  #allocation0 [shape = 'u32[]', space=smem, size = 0x4, offset = 0x4, fixed_abs, tag = 'smem constant byte address 0x4 - core index']
  #allocation1 [shape = 'u32[72,128]{1,0:T(1,128)}', space=vmem, size = 0x9000, scoped, tag = 'internal scratch']
  %s0 = inlined_call_operand.vmem [shape: f32[8,2], index: 0, kind: input, shape index: {}]
  %s1 = inlined_call_operand.hbm [shape: f32[400,128], index: 1, kind: input, shape index: {}]
  %s2 = inlined_call_operand.hbm [shape: f32[136,384], index: 2, kind: input, shape index: {}]
  %s3 = inlined_call_operand.hbm [shape: f32[8,384], index: 3, kind: output, shape index: {}]
  %s4 = sld [smem:[#allocation0]]
  $region30: #{decoder_forward.1} parent=0
    _
  %s6 = ssub.s32 1, %s4
  %s7 = scalar_select 0, %s6, %s4
  $region1: #{decoder_forward.1} parent=0
    #allocation2 [shape = 'u8[204800]{0}', space=vmem, size = 0x32000, scoped, tag = 'input window, operand 1, single buffered']
    #allocation3 [shape = 's32[1]{0}', space=sflag, size = 0x4, scoped, tag = 'scoped memory for decoder_forward.1']
    #allocation4 [shape = 's32[1]{0}', space=sflag, size = 0x4, scoped, tag = 'scoped memory for decoder_forward.1']
    #allocation5 [shape = 'u8[208896]{0}', space=vmem, size = 0x33000, scoped, tag = 'input window, operand 2, single buffered']
    #allocation6 [shape = 's32[1]{0}', space=sflag, size = 0x4, scoped, tag = 'scoped memory for decoder_forward.1']
    #allocation7 [shape = 'u8[12288]{0}', space=vmem, size = 0x3000, scoped, tag = 'output window, operand 0, single buffered']
    %8 = vsyncpa [#allocation3], 0
    %9 = vsyncpa [#allocation6], 0
    %10 = vsyncpa [#allocation4], 0
    // Predicated region
    $region2: #{decoder_forward.1} parent=1 // pred_check
      _
    $region3: #{decoder_forward.1} parent=1 // pred_check_branch
      %12 = sbr.rel (0) target = $region5
    $region4: #{decoder_forward.1} parent=1 // pred_region
      _
    $region5: #{decoder_forward.1} parent=1 // pred_fallthru
      _
    // Predicated region
    $region6: #{decoder_forward.1} parent=1 // pred_check
      _
    $region7: #{decoder_forward.1} parent=1 // pred_check_branch
      %14 = sbr.rel (0) target = $region9
    $region8: #{decoder_forward.1} parent=1 // pred_region
      %16 = vsyncadd [#allocation3], 0
      %s17 = sshll.u32 %s1, 4
      %s18 = int_to_ptr.hbm [resolvable:$true] %s17
      %s19 = sshll.u32 [#allocation2], 4
      %s20 = int_to_ptr.vmem [resolvable:$true] %s19
      %25 = dma.hbm_to_vmem [thread:$0]  %s18, 6400, %s20, [#allocation3], 128, 128, 8
    $region9: #{decoder_forward.1} parent=1 // pred_fallthru
      _
    // Predicated region
    $region10: #{decoder_forward.1} parent=1 // pred_check
      _
    $region11: #{decoder_forward.1} parent=1 // pred_check_branch
      %27 = sbr.rel (0) target = $region13
    $region12: #{decoder_forward.1} parent=1 // pred_region
      %29 = vsyncadd [#allocation6], 0
      %s30 = sshll.u32 %s2, 4
      %s31 = int_to_ptr.hbm [resolvable:$true] %s30
      %s32 = sshll.u32 [#allocation5], 4
      %s33 = int_to_ptr.vmem [resolvable:$true] %s32
      %38 = dma.hbm_to_vmem [thread:$0]  %s31, 6528, %s33, [#allocation6], 384, 384, 24
    $region13: #{decoder_forward.1} parent=1 // pred_fallthru
      _
    // Predicated region
    $region14: #{decoder_forward.1} parent=1 // pred_check
      _
    $region15: #{decoder_forward.1} parent=1 // pred_check_branch
      %40 = sbr.rel (0) target = $region17
    $region16: #{decoder_forward.1} parent=1 // pred_region
      %42 = dma.done [#allocation3], 6400
    $region17: #{decoder_forward.1} parent=1 // pred_fallthru
      _
    // Predicated region
    $region18: #{decoder_forward.1} parent=1 // pred_check
      _
    $region19: #{decoder_forward.1} parent=1 // pred_check_branch
      %44 = sbr.rel (0) target = $region21
    $region20: #{decoder_forward.1} parent=1 // pred_region
      %46 = dma.done [#allocation6], 6528
    $region21: #{decoder_forward.1} parent=1 // pred_fallthru
      _
    %v47 = vld [vmem:[%s0] sm:$0xff]
    %v48 = vld [vmem:[#allocation2] sm:$0x1]
    %50 = vset.pattern.permute.xlu0 0
    %51 = vperm.xlu0 %50, %v47
    %v52 = vpop.permute.xlu0 %51
    %v54 = vperm.slane %v48, 0
    %v55 = vmul.f32 %v52, %v54
    %v56 = vld [vmem:[#allocation2 + $0x1] sm:$0x1]
    %57 = vset.pattern.permute.xlu0 1
    %58 = vperm.xlu0 %57, %v47
    %v59 = vpop.permute.xlu0 %58
    %v61 = vperm.slane %v56, 0
    %v62 = vmul.f32 %v59, %v61
    %v63 = vadd.f32 %v55, %v62
    %v64 = vld [vmem:[#allocation2 + $0x188] sm:$0x1]
    %v65 = vld [vmem:[#allocation2 + $0x189] sm:$0x1]
    %v66 = vrot.slane %v63, 4
    %v67 = vadd.f32 %v63, %v66
    %v68 = vrot.slane %v67, 2
    %v69 = vadd.f32 %v67, %v68
    %v70 = vrot.slane %v69, 1
    %v71 = vadd.f32 %v69, %v70
    %v72 = vmul.f32 %v63, %v63
    %v73 = vrot.slane %v72, 4
    %v74 = vadd.f32 %v72, %v73
    %v75 = vrot.slane %v74, 2
    %v76 = vadd.f32 %v74, %v75
    %v77 = vrot.slane %v76, 1
    %v78 = vadd.f32 %v76, %v77
    %v79 = vmul.f32 %v71, 0.125
    %v80 = vmul.f32 %v78, 0.125
    %v81 = vmul.f32 %v79, %v79
    %v82 = vsub.f32 %v80, %v81
    %v83 = vmax.f32 %v82, 0.0
    %v84 = vadd.f32 %v83, 1e-05
    %v85 = vrsqrt.pop %v84
    %v86 = vmul.f32 %v85, %v84
    %v87 = vmul.f32 %v86, %v85
    %v88 = vmul.f32 0.5, %v87
    %v89 = vsub.f32 1.5, %v88
    %v90 = vmul.f32 %v85, %v89
    %vm91 = vweird.f32 %v84
    %vm92 = vweird.f32 %v85
    %vm93 = vmor %vm91, %vm92
    %v94 = vsel %vm93, %v85, %v90
    %v95 = vmul.f32 %v94, %v64
    %v96 = vmul.f32 %v79, %v95
    %v97 = vsub.f32 %v65, %v96
    %v98 = vperm.slane %v95, 0
    %v99 = vmul.f32 %v63, %v98
    %v100 = vperm.slane %v97, 0
    %v101 = vadd.f32 %v99, %v100
    %v102 = vld [vmem:[#allocation2 + $0x8] sm:$0xff]
    %v103 = vld [vmem:[#allocation2 + $0x10] sm:$0xff]
    %v104 = vld [vmem:[#allocation2 + $0x18] sm:$0xff]
    %v105 = vld [vmem:[#allocation2 + $0x20] sm:$0xff]
    %v106 = vld [vmem:[#allocation2 + $0x28] sm:$0xff]
    %v107 = vld [vmem:[#allocation2 + $0x30] sm:$0xff]
    %v108 = vld [vmem:[#allocation2 + $0x38] sm:$0xff]
    %v109 = vld [vmem:[#allocation2 + $0x40] sm:$0xff]
    %v110 = vld [vmem:[#allocation2 + $0x48] sm:$0xff]
    %v111 = vld [vmem:[#allocation2 + $0x50] sm:$0xff]
    %v112 = vld [vmem:[#allocation2 + $0x58] sm:$0xff]
    %v113 = vld [vmem:[#allocation2 + $0x60] sm:$0xff]
    %v114 = vld [vmem:[#allocation2 + $0x68] sm:$0xff]
    %v115 = vld [vmem:[#allocation2 + $0x70] sm:$0xff]
    %v116 = vld [vmem:[#allocation2 + $0x78] sm:$0xff]
    %v117 = vld [vmem:[#allocation2 + $0x80] sm:$0xff]
    %v118 = vand.u32 %v117, 4294901760
    %119 = vmatpush.msra.mxu0 %v118
    %v120 = vand.u32 %v116, 4294901760
    %121 = vmatpush.msra.mxu0 %v120
    %v122 = vand.u32 %v115, 4294901760
    %123 = vmatpush.msra.mxu0 %v122
    %v124 = vand.u32 %v114, 4294901760
    %125 = vmatpush.msra.mxu0 %v124
    %v126 = vand.u32 %v113, 4294901760
    %127 = vmatpush.msra.mxu0 %v126
    %v128 = vand.u32 %v112, 4294901760
    %129 = vmatpush.msra.mxu0 %v128
    %v130 = vand.u32 %v111, 4294901760
    %131 = vmatpush.msra.mxu0 %v130
    %v132 = vand.u32 %v110, 4294901760
    %133 = vmatpush.msra.mxu0 %v132
    %v134 = vand.u32 %v109, 4294901760
    %135 = vmatpush.msra.mxu0 %v134
    %v136 = vand.u32 %v108, 4294901760
    %137 = vmatpush.msra.mxu0 %v136
    %v138 = vand.u32 %v107, 4294901760
    %139 = vmatpush.msra.mxu0 %v138
    %v140 = vand.u32 %v106, 4294901760
    %141 = vmatpush.msra.mxu0 %v140
    %v142 = vand.u32 %v105, 4294901760
    %143 = vmatpush.msra.mxu0 %v142
    %v144 = vand.u32 %v104, 4294901760
    %145 = vmatpush.msra.mxu0 %v144
    %v146 = vand.u32 %v103, 4294901760
    %147 = vmatpush.msra.mxu0 %v146
    %v148 = vand.u32 %v102, 4294901760
    %149 = vmatpush.msra.mxu0 %v148
    %v150 = vand.u32 %v101, 4294901760
    %v151 = vsub.f32 %v101, %v150
    %v152 = vand.u32 %v151, 4294901760
    %v153 = vsub.f32 %v151, %v152
    %v154 = vand.u32 %v153, 4294901760
    %155 = vmatmul.f32.gmra.mxu0 %v154
    %v156 = vpop.f32.mrf.mxu0
    %v157 = vadd.f32 0.0, %v156
    %158 = vdwg.mxu0
    %v159 = vand.u32 %v117, 4294901760
    %v160 = vsub.f32 %v117, %v159
    %v161 = vand.u32 %v160, 4294901760
    %v162 = vsub.f32 %v160, %v161
    %v163 = vand.u32 %v162, 4294901760
    %164 = vmatpush.msra.mxu0 %v163
    %v165 = vand.u32 %v116, 4294901760
    %v166 = vsub.f32 %v116, %v165
    %v167 = vand.u32 %v166, 4294901760
    %v168 = vsub.f32 %v166, %v167
    %v169 = vand.u32 %v168, 4294901760
    %170 = vmatpush.msra.mxu0 %v169
    %v171 = vand.u32 %v115, 4294901760
    %v172 = vsub.f32 %v115, %v171
    %v173 = vand.u32 %v172, 4294901760
    %v174 = vsub.f32 %v172, %v173
    %v175 = vand.u32 %v174, 4294901760
    %176 = vmatpush.msra.mxu0 %v175
    %v177 = vand.u32 %v114, 4294901760
    %v178 = vsub.f32 %v114, %v177
    %v179 = vand.u32 %v178, 4294901760
    %v180 = vsub.f32 %v178, %v179
    %v181 = vand.u32 %v180, 4294901760
    %182 = vmatpush.msra.mxu0 %v181
    %v183 = vand.u32 %v113, 4294901760
    %v184 = vsub.f32 %v113, %v183
    %v185 = vand.u32 %v184, 4294901760
    %v186 = vsub.f32 %v184, %v185
    %v187 = vand.u32 %v186, 4294901760
    %188 = vmatpush.msra.mxu0 %v187
    %v189 = vand.u32 %v112, 4294901760
    %v190 = vsub.f32 %v112, %v189
    %v191 = vand.u32 %v190, 4294901760
    %v192 = vsub.f32 %v190, %v191
    %v193 = vand.u32 %v192, 4294901760
    %194 = vmatpush.msra.mxu0 %v193
    %v195 = vand.u32 %v111, 4294901760
    %v196 = vsub.f32 %v111, %v195
    %v197 = vand.u32 %v196, 4294901760
    %v198 = vsub.f32 %v196, %v197
    %v199 = vand.u32 %v198, 4294901760
    %200 = vmatpush.msra.mxu0 %v199
    %v201 = vand.u32 %v110, 4294901760
    %v202 = vsub.f32 %v110, %v201
    %v203 = vand.u32 %v202, 4294901760
    %v204 = vsub.f32 %v202, %v203
    %v205 = vand.u32 %v204, 4294901760
    %206 = vmatpush.msra.mxu0 %v205
    %v207 = vand.u32 %v109, 4294901760
    %v208 = vsub.f32 %v109, %v207
    %v209 = vand.u32 %v208, 4294901760
    %v210 = vsub.f32 %v208, %v209
    %v211 = vand.u32 %v210, 4294901760
    %212 = vmatpush.msra.mxu0 %v211
    %v213 = vand.u32 %v108, 4294901760
    %v214 = vsub.f32 %v108, %v213
    %v215 = vand.u32 %v214, 4294901760
    %v216 = vsub.f32 %v214, %v215
    %v217 = vand.u32 %v216, 4294901760
    %218 = vmatpush.msra.mxu0 %v217
    %v219 = vand.u32 %v107, 4294901760
    %v220 = vsub.f32 %v107, %v219
    %v221 = vand.u32 %v220, 4294901760
    %v222 = vsub.f32 %v220, %v221
    %v223 = vand.u32 %v222, 4294901760
    %224 = vmatpush.msra.mxu0 %v223
    %v225 = vand.u32 %v106, 4294901760
    %v226 = vsub.f32 %v106, %v225
    %v227 = vand.u32 %v226, 4294901760
    %v228 = vsub.f32 %v226, %v227
    %v229 = vand.u32 %v228, 4294901760
    %230 = vmatpush.msra.mxu0 %v229
    %v231 = vand.u32 %v105, 4294901760
    %v232 = vsub.f32 %v105, %v231
    %v233 = vand.u32 %v232, 4294901760
    %v234 = vsub.f32 %v232, %v233
    %v235 = vand.u32 %v234, 4294901760
    %236 = vmatpush.msra.mxu0 %v235
    %v237 = vand.u32 %v104, 4294901760
    %v238 = vsub.f32 %v104, %v237
    %v239 = vand.u32 %v238, 4294901760
    %v240 = vsub.f32 %v238, %v239
    %v241 = vand.u32 %v240, 4294901760
    %242 = vmatpush.msra.mxu0 %v241
    %v243 = vand.u32 %v103, 4294901760
    %v244 = vsub.f32 %v103, %v243
    %v245 = vand.u32 %v244, 4294901760
    %v246 = vsub.f32 %v244, %v245
    %v247 = vand.u32 %v246, 4294901760
    %248 = vmatpush.msra.mxu0 %v247
    %v249 = vand.u32 %v102, 4294901760
    %v250 = vsub.f32 %v102, %v249
    %v251 = vand.u32 %v250, 4294901760
    %v252 = vsub.f32 %v250, %v251
    %v253 = vand.u32 %v252, 4294901760
    %254 = vmatpush.msra.mxu0 %v253
    %v255 = vand.u32 %v101, 4294901760
    %256 = vmatmul.f32.gmra.mxu0 %v255
    %v257 = vpop.f32.mrf.mxu0
    %v258 = vadd.f32 %v157, %v257
    %259 = vdwg.mxu0
    %v260 = vand.u32 %v117, 4294901760
    %v261 = vsub.f32 %v117, %v260
    %262 = vmatpush.msra.mxu0 %v261
    %v263 = vand.u32 %v116, 4294901760
    %v264 = vsub.f32 %v116, %v263
    %265 = vmatpush.msra.mxu0 %v264
    %v266 = vand.u32 %v115, 4294901760
    %v267 = vsub.f32 %v115, %v266
    %268 = vmatpush.msra.mxu0 %v267
    %v269 = vand.u32 %v114, 4294901760
    %v270 = vsub.f32 %v114, %v269
    %271 = vmatpush.msra.mxu0 %v270
    %v272 = vand.u32 %v113, 4294901760
    %v273 = vsub.f32 %v113, %v272
    %274 = vmatpush.msra.mxu0 %v273
    %v275 = vand.u32 %v112, 4294901760
    %v276 = vsub.f32 %v112, %v275
    %277 = vmatpush.msra.mxu0 %v276
    %v278 = vand.u32 %v111, 4294901760
    %v279 = vsub.f32 %v111, %v278
    %280 = vmatpush.msra.mxu0 %v279
    %v281 = vand.u32 %v110, 4294901760
    %v282 = vsub.f32 %v110, %v281
    %283 = vmatpush.msra.mxu0 %v282
    %v284 = vand.u32 %v109, 4294901760
    %v285 = vsub.f32 %v109, %v284
    %286 = vmatpush.msra.mxu0 %v285
    %v287 = vand.u32 %v108, 4294901760
    %v288 = vsub.f32 %v108, %v287
    %289 = vmatpush.msra.mxu0 %v288
    %v290 = vand.u32 %v107, 4294901760
    %v291 = vsub.f32 %v107, %v290
    %292 = vmatpush.msra.mxu0 %v291
    %v293 = vand.u32 %v106, 4294901760
    %v294 = vsub.f32 %v106, %v293
    %295 = vmatpush.msra.mxu0 %v294
    %v296 = vand.u32 %v105, 4294901760
    %v297 = vsub.f32 %v105, %v296
    %298 = vmatpush.msra.mxu0 %v297
    %v299 = vand.u32 %v104, 4294901760
    %v300 = vsub.f32 %v104, %v299
    %301 = vmatpush.msra.mxu0 %v300
    %v302 = vand.u32 %v103, 4294901760
    %v303 = vsub.f32 %v103, %v302
    %304 = vmatpush.msra.mxu0 %v303
    %v305 = vand.u32 %v102, 4294901760
    %v306 = vsub.f32 %v102, %v305
    %307 = vmatpush.msra.mxu0 %v306
    %v308 = vand.u32 %v101, 4294901760
    %v309 = vsub.f32 %v101, %v308
    %310 = vmatmul.f32.gmra.mxu0 %v309
    %v311 = vpop.f32.mrf.mxu0
    %v312 = vadd.f32 %v258, %v311
    %313 = vdwg.mxu0
    %v314 = vand.u32 %v117, 4294901760
    %315 = vmatpush.msra.mxu0 %v314
    %v316 = vand.u32 %v116, 4294901760
    %317 = vmatpush.msra.mxu0 %v316
    %v318 = vand.u32 %v115, 4294901760
    %319 = vmatpush.msra.mxu0 %v318
    %v320 = vand.u32 %v114, 4294901760
    %321 = vmatpush.msra.mxu0 %v320
    %v322 = vand.u32 %v113, 4294901760
    %323 = vmatpush.msra.mxu0 %v322
    %v324 = vand.u32 %v112, 4294901760
    %325 = vmatpush.msra.mxu0 %v324
    %v326 = vand.u32 %v111, 4294901760
    %327 = vmatpush.msra.mxu0 %v326
    %v328 = vand.u32 %v110, 4294901760
    %329 = vmatpush.msra.mxu0 %v328
    %v330 = vand.u32 %v109, 4294901760
    %331 = vmatpush.msra.mxu0 %v330
    %v332 = vand.u32 %v108, 4294901760
    %333 = vmatpush.msra.mxu0 %v332
    %v334 = vand.u32 %v107, 4294901760
    %335 = vmatpush.msra.mxu0 %v334
    %v336 = vand.u32 %v106, 4294901760
    %337 = vmatpush.msra.mxu0 %v336
    %v338 = vand.u32 %v105, 4294901760
    %339 = vmatpush.msra.mxu0 %v338
    %v340 = vand.u32 %v104, 4294901760
    %341 = vmatpush.msra.mxu0 %v340
    %v342 = vand.u32 %v103, 4294901760
    %343 = vmatpush.msra.mxu0 %v342
    %v344 = vand.u32 %v102, 4294901760
    %345 = vmatpush.msra.mxu0 %v344
    %v346 = vand.u32 %v101, 4294901760
    %v347 = vsub.f32 %v101, %v346
    %v348 = vand.u32 %v347, 4294901760
    %349 = vmatmul.f32.gmra.mxu0 %v348
    %v350 = vpop.f32.mrf.mxu0
    %v351 = vadd.f32 %v312, %v350
    %352 = vdwg.mxu0
    %v353 = vand.u32 %v117, 4294901760
    %v354 = vsub.f32 %v117, %v353
    %v355 = vand.u32 %v354, 4294901760
    %356 = vmatpush.msra.mxu0 %v355
    %v357 = vand.u32 %v116, 4294901760
    %v358 = vsub.f32 %v116, %v357
    %v359 = vand.u32 %v358, 4294901760
    %360 = vmatpush.msra.mxu0 %v359
    %v361 = vand.u32 %v115, 4294901760
    %v362 = vsub.f32 %v115, %v361
    %v363 = vand.u32 %v362, 4294901760
    %364 = vmatpush.msra.mxu0 %v363
    %v365 = vand.u32 %v114, 4294901760
    %v366 = vsub.f32 %v114, %v365
    %v367 = vand.u32 %v366, 4294901760
    %368 = vmatpush.msra.mxu0 %v367
    %v369 = vand.u32 %v113, 4294901760
    %v370 = vsub.f32 %v113, %v369
    %v371 = vand.u32 %v370, 4294901760
    %372 = vmatpush.msra.mxu0 %v371
    %v373 = vand.u32 %v112, 4294901760
    %v374 = vsub.f32 %v112, %v373
    %v375 = vand.u32 %v374, 4294901760
    %376 = vmatpush.msra.mxu0 %v375
    %v377 = vand.u32 %v111, 4294901760
    %v378 = vsub.f32 %v111, %v377
    %v379 = vand.u32 %v378, 4294901760
    %380 = vmatpush.msra.mxu0 %v379
    %v381 = vand.u32 %v110, 4294901760
    %v382 = vsub.f32 %v110, %v381
    %v383 = vand.u32 %v382, 4294901760
    %384 = vmatpush.msra.mxu0 %v383
    %v385 = vand.u32 %v109, 4294901760
    %v386 = vsub.f32 %v109, %v385
    %v387 = vand.u32 %v386, 4294901760
    %388 = vmatpush.msra.mxu0 %v387
    %v389 = vand.u32 %v108, 4294901760
    %v390 = vsub.f32 %v108, %v389
    %v391 = vand.u32 %v390, 4294901760
    %392 = vmatpush.msra.mxu0 %v391
    %v393 = vand.u32 %v107, 4294901760
    %v394 = vsub.f32 %v107, %v393
    %v395 = vand.u32 %v394, 4294901760
    %396 = vmatpush.msra.mxu0 %v395
    %v397 = vand.u32 %v106, 4294901760
    %v398 = vsub.f32 %v106, %v397
    %v399 = vand.u32 %v398, 4294901760
    %400 = vmatpush.msra.mxu0 %v399
    %v401 = vand.u32 %v105, 4294901760
    %v402 = vsub.f32 %v105, %v401
    %v403 = vand.u32 %v402, 4294901760
    %404 = vmatpush.msra.mxu0 %v403
    %v405 = vand.u32 %v104, 4294901760
    %v406 = vsub.f32 %v104, %v405
    %v407 = vand.u32 %v406, 4294901760
    %408 = vmatpush.msra.mxu0 %v407
    %v409 = vand.u32 %v103, 4294901760
    %v410 = vsub.f32 %v103, %v409
    %v411 = vand.u32 %v410, 4294901760
    %412 = vmatpush.msra.mxu0 %v411
    %v413 = vand.u32 %v102, 4294901760
    %v414 = vsub.f32 %v102, %v413
    %v415 = vand.u32 %v414, 4294901760
    %416 = vmatpush.msra.mxu0 %v415
    %v417 = vand.u32 %v101, 4294901760
    %418 = vmatmul.f32.gmra.mxu0 %v417
    %v419 = vpop.f32.mrf.mxu0
    %v420 = vadd.f32 %v351, %v419
    %421 = vdwg.mxu0
    %v422 = vand.u32 %v117, 4294901760
    %423 = vmatpush.msra.mxu0 %v422
    %v424 = vand.u32 %v116, 4294901760
    %425 = vmatpush.msra.mxu0 %v424
    %v426 = vand.u32 %v115, 4294901760
    %427 = vmatpush.msra.mxu0 %v426
    %v428 = vand.u32 %v114, 4294901760
    %429 = vmatpush.msra.mxu0 %v428
    %v430 = vand.u32 %v113, 4294901760
    %431 = vmatpush.msra.mxu0 %v430
    %v432 = vand.u32 %v112, 4294901760
    %433 = vmatpush.msra.mxu0 %v432
    %v434 = vand.u32 %v111, 4294901760
    %435 = vmatpush.msra.mxu0 %v434
    %v436 = vand.u32 %v110, 4294901760
    %437 = vmatpush.msra.mxu0 %v436
    %v438 = vand.u32 %v109, 4294901760
    %439 = vmatpush.msra.mxu0 %v438
    %v440 = vand.u32 %v108, 4294901760
    %441 = vmatpush.msra.mxu0 %v440
    %v442 = vand.u32 %v107, 4294901760
    %443 = vmatpush.msra.mxu0 %v442
    %v444 = vand.u32 %v106, 4294901760
    %445 = vmatpush.msra.mxu0 %v444
    %v446 = vand.u32 %v105, 4294901760
    %447 = vmatpush.msra.mxu0 %v446
    %v448 = vand.u32 %v104, 4294901760
    %449 = vmatpush.msra.mxu0 %v448
    %v450 = vand.u32 %v103, 4294901760
    %451 = vmatpush.msra.mxu0 %v450
    %v452 = vand.u32 %v102, 4294901760
    %453 = vmatpush.msra.mxu0 %v452
    %v454 = vand.u32 %v101, 4294901760
    %455 = vmatmul.f32.gmra.mxu0 %v454
    %v456 = vpop.f32.mrf.mxu0
    %v457 = vadd.f32 %v420, %v456
    %458 = vdwg.mxu0
    %v459 = vld [vmem:[#allocation2 + $0x18a] sm:$0x1]
    %v460 = vld [vmem:[#allocation2 + $0x18b] sm:$0x1]
    %v461 = vrot.slane %v457, 4
    %v462 = vadd.f32 %v457, %v461
    %v463 = vrot.slane %v462, 2
    %v464 = vadd.f32 %v462, %v463
    %v465 = vrot.slane %v464, 1
    %v466 = vadd.f32 %v464, %v465
    %v467 = vmul.f32 %v457, %v457
    %v468 = vrot.slane %v467, 4
    %v469 = vadd.f32 %v467, %v468
    %v470 = vrot.slane %v469, 2
    %v471 = vadd.f32 %v469, %v470
    %v472 = vrot.slane %v471, 1
    %v473 = vadd.f32 %v471, %v472
    %v474 = vmul.f32 %v466, 0.125
    %v475 = vmul.f32 %v473, 0.125
    %v476 = vmul.f32 %v474, %v474
    %v477 = vsub.f32 %v475, %v476
    %v478 = vmax.f32 %v477, 0.0
    %v479 = vadd.f32 %v478, 1e-05
    %v480 = vrsqrt.pop %v479
    %v481 = vmul.f32 %v480, %v479
    %v482 = vmul.f32 %v481, %v480
    %v483 = vmul.f32 0.5, %v482
    %v484 = vsub.f32 1.5, %v483
    %v485 = vmul.f32 %v480, %v484
    %vm486 = vweird.f32 %v479
    %vm487 = vweird.f32 %v480
    %vm488 = vmor %vm486, %vm487
    %v489 = vsel %vm488, %v480, %v485
    %v490 = vmul.f32 %v489, %v459
    %v491 = vmul.f32 %v474, %v490
    %v492 = vsub.f32 %v460, %v491
    %v493 = vperm.slane %v490, 0
    %v494 = vmul.f32 %v457, %v493
    %v495 = vperm.slane %v492, 0
    %v496 = vadd.f32 %v494, %v495
    %v497 = vld [vmem:[#allocation2 + $0x88] sm:$0xff]
    %v498 = vld [vmem:[#allocation2 + $0x90] sm:$0xff]
    %v499 = vld [vmem:[#allocation2 + $0x98] sm:$0xff]
    %v500 = vld [vmem:[#allocation2 + $0xa0] sm:$0xff]
    %v501 = vld [vmem:[#allocation2 + $0xa8] sm:$0xff]
    %v502 = vld [vmem:[#allocation2 + $0xb0] sm:$0xff]
    %v503 = vld [vmem:[#allocation2 + $0xb8] sm:$0xff]
    %v504 = vld [vmem:[#allocation2 + $0xc0] sm:$0xff]
    %v505 = vld [vmem:[#allocation2 + $0xc8] sm:$0xff]
    %v506 = vld [vmem:[#allocation2 + $0xd0] sm:$0xff]
    %v507 = vld [vmem:[#allocation2 + $0xd8] sm:$0xff]
    %v508 = vld [vmem:[#allocation2 + $0xe0] sm:$0xff]
    %v509 = vld [vmem:[#allocation2 + $0xe8] sm:$0xff]
    %v510 = vld [vmem:[#allocation2 + $0xf0] sm:$0xff]
    %v511 = vld [vmem:[#allocation2 + $0xf8] sm:$0xff]
    %v512 = vld [vmem:[#allocation2 + $0x100] sm:$0xff]
    %v513 = vand.u32 %v512, 4294901760
    %514 = vmatpush.msra.mxu0 %v513
    %v515 = vand.u32 %v511, 4294901760
    %516 = vmatpush.msra.mxu0 %v515
    %v517 = vand.u32 %v510, 4294901760
    %518 = vmatpush.msra.mxu0 %v517
    %v519 = vand.u32 %v509, 4294901760
    %520 = vmatpush.msra.mxu0 %v519
    %v521 = vand.u32 %v508, 4294901760
    %522 = vmatpush.msra.mxu0 %v521
    %v523 = vand.u32 %v507, 4294901760
    %524 = vmatpush.msra.mxu0 %v523
    %v525 = vand.u32 %v506, 4294901760
    %526 = vmatpush.msra.mxu0 %v525
    %v527 = vand.u32 %v505, 4294901760
    %528 = vmatpush.msra.mxu0 %v527
    %v529 = vand.u32 %v504, 4294901760
    %530 = vmatpush.msra.mxu0 %v529
    %v531 = vand.u32 %v503, 4294901760
    %532 = vmatpush.msra.mxu0 %v531
    %v533 = vand.u32 %v502, 4294901760
    %534 = vmatpush.msra.mxu0 %v533
    %v535 = vand.u32 %v501, 4294901760
    %536 = vmatpush.msra.mxu0 %v535
    %v537 = vand.u32 %v500, 4294901760
    %538 = vmatpush.msra.mxu0 %v537
    %v539 = vand.u32 %v499, 4294901760
    %540 = vmatpush.msra.mxu0 %v539
    %v541 = vand.u32 %v498, 4294901760
    %542 = vmatpush.msra.mxu0 %v541
    %v543 = vand.u32 %v497, 4294901760
    %544 = vmatpush.msra.mxu0 %v543
    %v545 = vand.u32 %v496, 4294901760
    %v546 = vsub.f32 %v496, %v545
    %v547 = vand.u32 %v546, 4294901760
    %v548 = vsub.f32 %v546, %v547
    %v549 = vand.u32 %v548, 4294901760
    %550 = vmatmul.f32.gmra.mxu0 %v549
    %v551 = vpop.f32.mrf.mxu0
    %v552 = vadd.f32 0.0, %v551
    %553 = vdwg.mxu0
    %v554 = vand.u32 %v512, 4294901760
    %v555 = vsub.f32 %v512, %v554
    %v556 = vand.u32 %v555, 4294901760
    %v557 = vsub.f32 %v555, %v556
    %v558 = vand.u32 %v557, 4294901760
    %559 = vmatpush.msra.mxu0 %v558
    %v560 = vand.u32 %v511, 4294901760
    %v561 = vsub.f32 %v511, %v560
    %v562 = vand.u32 %v561, 4294901760
    %v563 = vsub.f32 %v561, %v562
    %v564 = vand.u32 %v563, 4294901760
    %565 = vmatpush.msra.mxu0 %v564
    %v566 = vand.u32 %v510, 4294901760
    %v567 = vsub.f32 %v510, %v566
    %v568 = vand.u32 %v567, 4294901760
    %v569 = vsub.f32 %v567, %v568
    %v570 = vand.u32 %v569, 4294901760
    %571 = vmatpush.msra.mxu0 %v570
    %v572 = vand.u32 %v509, 4294901760
    %v573 = vsub.f32 %v509, %v572
    %v574 = vand.u32 %v573, 4294901760
    %v575 = vsub.f32 %v573, %v574
    %v576 = vand.u32 %v575, 4294901760
    %577 = vmatpush.msra.mxu0 %v576
    %v578 = vand.u32 %v508, 4294901760
    %v579 = vsub.f32 %v508, %v578
    %v580 = vand.u32 %v579, 4294901760
    %v581 = vsub.f32 %v579, %v580
    %v582 = vand.u32 %v581, 4294901760
    %583 = vmatpush.msra.mxu0 %v582
    %v584 = vand.u32 %v507, 4294901760
    %v585 = vsub.f32 %v507, %v584
    %v586 = vand.u32 %v585, 4294901760
    %v587 = vsub.f32 %v585, %v586
    %v588 = vand.u32 %v587, 4294901760
    %589 = vmatpush.msra.mxu0 %v588
    %v590 = vand.u32 %v506, 4294901760
    %v591 = vsub.f32 %v506, %v590
    %v592 = vand.u32 %v591, 4294901760
    %v593 = vsub.f32 %v591, %v592
    %v594 = vand.u32 %v593, 4294901760
    %595 = vmatpush.msra.mxu0 %v594
    %v596 = vand.u32 %v505, 4294901760
    %v597 = vsub.f32 %v505, %v596
    %v598 = vand.u32 %v597, 4294901760
    %v599 = vsub.f32 %v597, %v598
    %v600 = vand.u32 %v599, 4294901760
    %601 = vmatpush.msra.mxu0 %v600
    %v602 = vand.u32 %v504, 4294901760
    %v603 = vsub.f32 %v504, %v602
    %v604 = vand.u32 %v603, 4294901760
    %v605 = vsub.f32 %v603, %v604
    %v606 = vand.u32 %v605, 4294901760
    %607 = vmatpush.msra.mxu0 %v606
    %v608 = vand.u32 %v503, 4294901760
    %v609 = vsub.f32 %v503, %v608
    %v610 = vand.u32 %v609, 4294901760
    %v611 = vsub.f32 %v609, %v610
    %v612 = vand.u32 %v611, 4294901760
    %613 = vmatpush.msra.mxu0 %v612
    %v614 = vand.u32 %v502, 4294901760
    %v615 = vsub.f32 %v502, %v614
    %v616 = vand.u32 %v615, 4294901760
    %v617 = vsub.f32 %v615, %v616
    %v618 = vand.u32 %v617, 4294901760
    %619 = vmatpush.msra.mxu0 %v618
    %v620 = vand.u32 %v501, 4294901760
    %v621 = vsub.f32 %v501, %v620
    %v622 = vand.u32 %v621, 4294901760
    %v623 = vsub.f32 %v621, %v622
    %v624 = vand.u32 %v623, 4294901760
    %625 = vmatpush.msra.mxu0 %v624
    %v626 = vand.u32 %v500, 4294901760
    %v627 = vsub.f32 %v500, %v626
    %v628 = vand.u32 %v627, 4294901760
    %v629 = vsub.f32 %v627, %v628
    %v630 = vand.u32 %v629, 4294901760
    %631 = vmatpush.msra.mxu0 %v630
    %v632 = vand.u32 %v499, 4294901760
    %v633 = vsub.f32 %v499, %v632
    %v634 = vand.u32 %v633, 4294901760
    %v635 = vsub.f32 %v633, %v634
    %v636 = vand.u32 %v635, 4294901760
    %637 = vmatpush.msra.mxu0 %v636
    %v638 = vand.u32 %v498, 4294901760
    %v639 = vsub.f32 %v498, %v638
    %v640 = vand.u32 %v639, 4294901760
    %v641 = vsub.f32 %v639, %v640
    %v642 = vand.u32 %v641, 4294901760
    %643 = vmatpush.msra.mxu0 %v642
    %v644 = vand.u32 %v497, 4294901760
    %v645 = vsub.f32 %v497, %v644
    %v646 = vand.u32 %v645, 4294901760
    %v647 = vsub.f32 %v645, %v646
    %v648 = vand.u32 %v647, 4294901760
    %649 = vmatpush.msra.mxu0 %v648
    %v650 = vand.u32 %v496, 4294901760
    %651 = vmatmul.f32.gmra.mxu0 %v650
    %v652 = vpop.f32.mrf.mxu0
    %v653 = vadd.f32 %v552, %v652
    %654 = vdwg.mxu0
    %v655 = vand.u32 %v512, 4294901760
    %v656 = vsub.f32 %v512, %v655
    %657 = vmatpush.msra.mxu0 %v656
    %v658 = vand.u32 %v511, 4294901760
    %v659 = vsub.f32 %v511, %v658
    %660 = vmatpush.msra.mxu0 %v659
    %v661 = vand.u32 %v510, 4294901760
    %v662 = vsub.f32 %v510, %v661
    %663 = vmatpush.msra.mxu0 %v662
    %v664 = vand.u32 %v509, 4294901760
    %v665 = vsub.f32 %v509, %v664
    %666 = vmatpush.msra.mxu0 %v665
    %v667 = vand.u32 %v508, 4294901760
    %v668 = vsub.f32 %v508, %v667
    %669 = vmatpush.msra.mxu0 %v668
    %v670 = vand.u32 %v507, 4294901760
    %v671 = vsub.f32 %v507, %v670
    %672 = vmatpush.msra.mxu0 %v671
    %v673 = vand.u32 %v506, 4294901760
    %v674 = vsub.f32 %v506, %v673
    %675 = vmatpush.msra.mxu0 %v674
    %v676 = vand.u32 %v505, 4294901760
    %v677 = vsub.f32 %v505, %v676
    %678 = vmatpush.msra.mxu0 %v677
    %v679 = vand.u32 %v504, 4294901760
    %v680 = vsub.f32 %v504, %v679
    %681 = vmatpush.msra.mxu0 %v680
    %v682 = vand.u32 %v503, 4294901760
    %v683 = vsub.f32 %v503, %v682
    %684 = vmatpush.msra.mxu0 %v683
    %v685 = vand.u32 %v502, 4294901760
    %v686 = vsub.f32 %v502, %v685
    %687 = vmatpush.msra.mxu0 %v686
    %v688 = vand.u32 %v501, 4294901760
    %v689 = vsub.f32 %v501, %v688
    %690 = vmatpush.msra.mxu0 %v689
    %v691 = vand.u32 %v500, 4294901760
    %v692 = vsub.f32 %v500, %v691
    %693 = vmatpush.msra.mxu0 %v692
    %v694 = vand.u32 %v499, 4294901760
    %v695 = vsub.f32 %v499, %v694
    %696 = vmatpush.msra.mxu0 %v695
    %v697 = vand.u32 %v498, 4294901760
    %v698 = vsub.f32 %v498, %v697
    %699 = vmatpush.msra.mxu0 %v698
    %v700 = vand.u32 %v497, 4294901760
    %v701 = vsub.f32 %v497, %v700
    %702 = vmatpush.msra.mxu0 %v701
    %v703 = vand.u32 %v496, 4294901760
    %v704 = vsub.f32 %v496, %v703
    %705 = vmatmul.f32.gmra.mxu0 %v704
    %v706 = vpop.f32.mrf.mxu0
    %v707 = vadd.f32 %v653, %v706
    %708 = vdwg.mxu0
    %v709 = vand.u32 %v512, 4294901760
    %710 = vmatpush.msra.mxu0 %v709
    %v711 = vand.u32 %v511, 4294901760
    %712 = vmatpush.msra.mxu0 %v711
    %v713 = vand.u32 %v510, 4294901760
    %714 = vmatpush.msra.mxu0 %v713
    %v715 = vand.u32 %v509, 4294901760
    %716 = vmatpush.msra.mxu0 %v715
    %v717 = vand.u32 %v508, 4294901760
    %718 = vmatpush.msra.mxu0 %v717
    %v719 = vand.u32 %v507, 4294901760
    %720 = vmatpush.msra.mxu0 %v719
    %v721 = vand.u32 %v506, 4294901760
    %722 = vmatpush.msra.mxu0 %v721
    %v723 = vand.u32 %v505, 4294901760
    %724 = vmatpush.msra.mxu0 %v723
    %v725 = vand.u32 %v504, 4294901760
    %726 = vmatpush.msra.mxu0 %v725
    %v727 = vand.u32 %v503, 4294901760
    %728 = vmatpush.msra.mxu0 %v727
    %v729 = vand.u32 %v502, 4294901760
    %730 = vmatpush.msra.mxu0 %v729
    %v731 = vand.u32 %v501, 4294901760
    %732 = vmatpush.msra.mxu0 %v731
    %v733 = vand.u32 %v500, 4294901760
    %734 = vmatpush.msra.mxu0 %v733
    %v735 = vand.u32 %v499, 4294901760
    %736 = vmatpush.msra.mxu0 %v735
    %v737 = vand.u32 %v498, 4294901760
    %738 = vmatpush.msra.mxu0 %v737
    %v739 = vand.u32 %v497, 4294901760
    %740 = vmatpush.msra.mxu0 %v739
    %v741 = vand.u32 %v496, 4294901760
    %v742 = vsub.f32 %v496, %v741
    %v743 = vand.u32 %v742, 4294901760
    %744 = vmatmul.f32.gmra.mxu0 %v743
    %v745 = vpop.f32.mrf.mxu0
    %v746 = vadd.f32 %v707, %v745
    %747 = vdwg.mxu0
    %v748 = vand.u32 %v512, 4294901760
    %v749 = vsub.f32 %v512, %v748
    %v750 = vand.u32 %v749, 4294901760
    %751 = vmatpush.msra.mxu0 %v750
    %v752 = vand.u32 %v511, 4294901760
    %v753 = vsub.f32 %v511, %v752
    %v754 = vand.u32 %v753, 4294901760
    %755 = vmatpush.msra.mxu0 %v754
    %v756 = vand.u32 %v510, 4294901760
    %v757 = vsub.f32 %v510, %v756
    %v758 = vand.u32 %v757, 4294901760
    %759 = vmatpush.msra.mxu0 %v758
    %v760 = vand.u32 %v509, 4294901760
    %v761 = vsub.f32 %v509, %v760
    %v762 = vand.u32 %v761, 4294901760
    %763 = vmatpush.msra.mxu0 %v762
    %v764 = vand.u32 %v508, 4294901760
    %v765 = vsub.f32 %v508, %v764
    %v766 = vand.u32 %v765, 4294901760
    %767 = vmatpush.msra.mxu0 %v766
    %v768 = vand.u32 %v507, 4294901760
    %v769 = vsub.f32 %v507, %v768
    %v770 = vand.u32 %v769, 4294901760
    %771 = vmatpush.msra.mxu0 %v770
    %v772 = vand.u32 %v506, 4294901760
    %v773 = vsub.f32 %v506, %v772
    %v774 = vand.u32 %v773, 4294901760
    %775 = vmatpush.msra.mxu0 %v774
    %v776 = vand.u32 %v505, 4294901760
    %v777 = vsub.f32 %v505, %v776
    %v778 = vand.u32 %v777, 4294901760
    %779 = vmatpush.msra.mxu0 %v778
    %v780 = vand.u32 %v504, 4294901760
    %v781 = vsub.f32 %v504, %v780
    %v782 = vand.u32 %v781, 4294901760
    %783 = vmatpush.msra.mxu0 %v782
    %v784 = vand.u32 %v503, 4294901760
    %v785 = vsub.f32 %v503, %v784
    %v786 = vand.u32 %v785, 4294901760
    %787 = vmatpush.msra.mxu0 %v786
    %v788 = vand.u32 %v502, 4294901760
    %v789 = vsub.f32 %v502, %v788
    %v790 = vand.u32 %v789, 4294901760
    %791 = vmatpush.msra.mxu0 %v790
    %v792 = vand.u32 %v501, 4294901760
    %v793 = vsub.f32 %v501, %v792
    %v794 = vand.u32 %v793, 4294901760
    %795 = vmatpush.msra.mxu0 %v794
    %v796 = vand.u32 %v500, 4294901760
    %v797 = vsub.f32 %v500, %v796
    %v798 = vand.u32 %v797, 4294901760
    %799 = vmatpush.msra.mxu0 %v798
    %v800 = vand.u32 %v499, 4294901760
    %v801 = vsub.f32 %v499, %v800
    %v802 = vand.u32 %v801, 4294901760
    %803 = vmatpush.msra.mxu0 %v802
    %v804 = vand.u32 %v498, 4294901760
    %v805 = vsub.f32 %v498, %v804
    %v806 = vand.u32 %v805, 4294901760
    %807 = vmatpush.msra.mxu0 %v806
    %v808 = vand.u32 %v497, 4294901760
    %v809 = vsub.f32 %v497, %v808
    %v810 = vand.u32 %v809, 4294901760
    %811 = vmatpush.msra.mxu0 %v810
    %v812 = vand.u32 %v496, 4294901760
    %813 = vmatmul.f32.gmra.mxu0 %v812
    %v814 = vpop.f32.mrf.mxu0
    %v815 = vadd.f32 %v746, %v814
    %816 = vdwg.mxu0
    %v817 = vand.u32 %v512, 4294901760
    %818 = vmatpush.msra.mxu0 %v817
    %v819 = vand.u32 %v511, 4294901760
    %820 = vmatpush.msra.mxu0 %v819
    %v821 = vand.u32 %v510, 4294901760
    %822 = vmatpush.msra.mxu0 %v821
    %v823 = vand.u32 %v509, 4294901760
    %824 = vmatpush.msra.mxu0 %v823
    %v825 = vand.u32 %v508, 4294901760
    %826 = vmatpush.msra.mxu0 %v825
    %v827 = vand.u32 %v507, 4294901760
    %828 = vmatpush.msra.mxu0 %v827
    %v829 = vand.u32 %v506, 4294901760
    %830 = vmatpush.msra.mxu0 %v829
    %v831 = vand.u32 %v505, 4294901760
    %832 = vmatpush.msra.mxu0 %v831
    %v833 = vand.u32 %v504, 4294901760
    %834 = vmatpush.msra.mxu0 %v833
    %v835 = vand.u32 %v503, 4294901760
    %836 = vmatpush.msra.mxu0 %v835
    %v837 = vand.u32 %v502, 4294901760
    %838 = vmatpush.msra.mxu0 %v837
    %v839 = vand.u32 %v501, 4294901760
    %840 = vmatpush.msra.mxu0 %v839
    %v841 = vand.u32 %v500, 4294901760
    %842 = vmatpush.msra.mxu0 %v841
    %v843 = vand.u32 %v499, 4294901760
    %844 = vmatpush.msra.mxu0 %v843
    %v845 = vand.u32 %v498, 4294901760
    %846 = vmatpush.msra.mxu0 %v845
    %v847 = vand.u32 %v497, 4294901760
    %848 = vmatpush.msra.mxu0 %v847
    %v849 = vand.u32 %v496, 4294901760
    %850 = vmatmul.f32.gmra.mxu0 %v849
    %v851 = vpop.f32.mrf.mxu0
    %v852 = vadd.f32 %v815, %v851
    %853 = vdwg.mxu0
    %v854 = vld [vmem:[#allocation2 + $0x18c] sm:$0x1]
    %v855 = vld [vmem:[#allocation2 + $0x18d] sm:$0x1]
    %v856 = vrot.slane %v852, 4
    %v857 = vadd.f32 %v852, %v856
    %v858 = vrot.slane %v857, 2
    %v859 = vadd.f32 %v857, %v858
    %v860 = vrot.slane %v859, 1
    %v861 = vadd.f32 %v859, %v860
    %v862 = vmul.f32 %v852, %v852
    %v863 = vrot.slane %v862, 4
    %v864 = vadd.f32 %v862, %v863
    %v865 = vrot.slane %v864, 2
    %v866 = vadd.f32 %v864, %v865
    %v867 = vrot.slane %v866, 1
    %v868 = vadd.f32 %v866, %v867
    %v869 = vmul.f32 %v861, 0.125
    %v870 = vmul.f32 %v868, 0.125
    %v871 = vmul.f32 %v869, %v869
    %v872 = vsub.f32 %v870, %v871
    %v873 = vmax.f32 %v872, 0.0
    %v874 = vadd.f32 %v873, 1e-05
    %v875 = vrsqrt.pop %v874
    %v876 = vmul.f32 %v875, %v874
    %v877 = vmul.f32 %v876, %v875
    %v878 = vmul.f32 0.5, %v877
    %v879 = vsub.f32 1.5, %v878
    %v880 = vmul.f32 %v875, %v879
    %vm881 = vweird.f32 %v874
    %vm882 = vweird.f32 %v875
    %vm883 = vmor %vm881, %vm882
    %v884 = vsel %vm883, %v875, %v880
    %v885 = vmul.f32 %v884, %v854
    %v886 = vmul.f32 %v869, %v885
    %v887 = vsub.f32 %v855, %v886
    %v888 = vperm.slane %v885, 0
    %v889 = vmul.f32 %v852, %v888
    %v890 = vperm.slane %v887, 0
    %v891 = vadd.f32 %v889, %v890
    %v892 = vld [vmem:[#allocation2 + $0x108] sm:$0xff]
    %v893 = vld [vmem:[#allocation2 + $0x110] sm:$0xff]
    %v894 = vld [vmem:[#allocation2 + $0x118] sm:$0xff]
    %v895 = vld [vmem:[#allocation2 + $0x120] sm:$0xff]
    %v896 = vld [vmem:[#allocation2 + $0x128] sm:$0xff]
    %v897 = vld [vmem:[#allocation2 + $0x130] sm:$0xff]
    %v898 = vld [vmem:[#allocation2 + $0x138] sm:$0xff]
    %v899 = vld [vmem:[#allocation2 + $0x140] sm:$0xff]
    %v900 = vld [vmem:[#allocation2 + $0x148] sm:$0xff]
    %v901 = vld [vmem:[#allocation2 + $0x150] sm:$0xff]
    %v902 = vld [vmem:[#allocation2 + $0x158] sm:$0xff]
    %v903 = vld [vmem:[#allocation2 + $0x160] sm:$0xff]
    %v904 = vld [vmem:[#allocation2 + $0x168] sm:$0xff]
    %v905 = vld [vmem:[#allocation2 + $0x170] sm:$0xff]
    %v906 = vld [vmem:[#allocation2 + $0x178] sm:$0xff]
    %v907 = vld [vmem:[#allocation2 + $0x180] sm:$0xff]
    %v908 = vand.u32 %v907, 4294901760
    %909 = vmatpush.msra.mxu0 %v908
    %v910 = vand.u32 %v906, 4294901760
    %911 = vmatpush.msra.mxu0 %v910
    %v912 = vand.u32 %v905, 4294901760
    %913 = vmatpush.msra.mxu0 %v912
    %v914 = vand.u32 %v904, 4294901760
    %915 = vmatpush.msra.mxu0 %v914
    %v916 = vand.u32 %v903, 4294901760
    %917 = vmatpush.msra.mxu0 %v916
    %v918 = vand.u32 %v902, 4294901760
    %919 = vmatpush.msra.mxu0 %v918
    %v920 = vand.u32 %v901, 4294901760
    %921 = vmatpush.msra.mxu0 %v920
    %v922 = vand.u32 %v900, 4294901760
    %923 = vmatpush.msra.mxu0 %v922
    %v924 = vand.u32 %v899, 4294901760
    %925 = vmatpush.msra.mxu0 %v924
    %v926 = vand.u32 %v898, 4294901760
    %927 = vmatpush.msra.mxu0 %v926
    %v928 = vand.u32 %v897, 4294901760
    %929 = vmatpush.msra.mxu0 %v928
    %v930 = vand.u32 %v896, 4294901760
    %931 = vmatpush.msra.mxu0 %v930
    %v932 = vand.u32 %v895, 4294901760
    %933 = vmatpush.msra.mxu0 %v932
    %v934 = vand.u32 %v894, 4294901760
    %935 = vmatpush.msra.mxu0 %v934
    %v936 = vand.u32 %v893, 4294901760
    %937 = vmatpush.msra.mxu0 %v936
    %v938 = vand.u32 %v892, 4294901760
    %939 = vmatpush.msra.mxu0 %v938
    %v940 = vand.u32 %v891, 4294901760
    %v941 = vsub.f32 %v891, %v940
    %v942 = vand.u32 %v941, 4294901760
    %v943 = vsub.f32 %v941, %v942
    %v944 = vand.u32 %v943, 4294901760
    %945 = vmatmul.f32.gmra.mxu0 %v944
    %v946 = vpop.f32.mrf.mxu0
    %v947 = vadd.f32 0.0, %v946
    %948 = vdwg.mxu0
    %v949 = vand.u32 %v907, 4294901760
    %v950 = vsub.f32 %v907, %v949
    %v951 = vand.u32 %v950, 4294901760
    %v952 = vsub.f32 %v950, %v951
    %v953 = vand.u32 %v952, 4294901760
    %954 = vmatpush.msra.mxu0 %v953
    %v955 = vand.u32 %v906, 4294901760
    %v956 = vsub.f32 %v906, %v955
    %v957 = vand.u32 %v956, 4294901760
    %v958 = vsub.f32 %v956, %v957
    %v959 = vand.u32 %v958, 4294901760
    %960 = vmatpush.msra.mxu0 %v959
    %v961 = vand.u32 %v905, 4294901760
    %v962 = vsub.f32 %v905, %v961
    %v963 = vand.u32 %v962, 4294901760
    %v964 = vsub.f32 %v962, %v963
    %v965 = vand.u32 %v964, 4294901760
    %966 = vmatpush.msra.mxu0 %v965
    %v967 = vand.u32 %v904, 4294901760
    %v968 = vsub.f32 %v904, %v967
    %v969 = vand.u32 %v968, 4294901760
    %v970 = vsub.f32 %v968, %v969
    %v971 = vand.u32 %v970, 4294901760
    %972 = vmatpush.msra.mxu0 %v971
    %v973 = vand.u32 %v903, 4294901760
    %v974 = vsub.f32 %v903, %v973
    %v975 = vand.u32 %v974, 4294901760
    %v976 = vsub.f32 %v974, %v975
    %v977 = vand.u32 %v976, 4294901760
    %978 = vmatpush.msra.mxu0 %v977
    %v979 = vand.u32 %v902, 4294901760
    %v980 = vsub.f32 %v902, %v979
    %v981 = vand.u32 %v980, 4294901760
    %v982 = vsub.f32 %v980, %v981
    %v983 = vand.u32 %v982, 4294901760
    %984 = vmatpush.msra.mxu0 %v983
    %v985 = vand.u32 %v901, 4294901760
    %v986 = vsub.f32 %v901, %v985
    %v987 = vand.u32 %v986, 4294901760
    %v988 = vsub.f32 %v986, %v987
    %v989 = vand.u32 %v988, 4294901760
    %990 = vmatpush.msra.mxu0 %v989
    %v991 = vand.u32 %v900, 4294901760
    %v992 = vsub.f32 %v900, %v991
    %v993 = vand.u32 %v992, 4294901760
    %v994 = vsub.f32 %v992, %v993
    %v995 = vand.u32 %v994, 4294901760
    %996 = vmatpush.msra.mxu0 %v995
    %v997 = vand.u32 %v899, 4294901760
    %v998 = vsub.f32 %v899, %v997
    %v999 = vand.u32 %v998, 4294901760
    %v1000 = vsub.f32 %v998, %v999
    %v1001 = vand.u32 %v1000, 4294901760
    %1002 = vmatpush.msra.mxu0 %v1001
    %v1003 = vand.u32 %v898, 4294901760
    %v1004 = vsub.f32 %v898, %v1003
    %v1005 = vand.u32 %v1004, 4294901760
    %v1006 = vsub.f32 %v1004, %v1005
    %v1007 = vand.u32 %v1006, 4294901760
    %1008 = vmatpush.msra.mxu0 %v1007
    %v1009 = vand.u32 %v897, 4294901760
    %v1010 = vsub.f32 %v897, %v1009
    %v1011 = vand.u32 %v1010, 4294901760
    %v1012 = vsub.f32 %v1010, %v1011
    %v1013 = vand.u32 %v1012, 4294901760
    %1014 = vmatpush.msra.mxu0 %v1013
    %v1015 = vand.u32 %v896, 4294901760
    %v1016 = vsub.f32 %v896, %v1015
    %v1017 = vand.u32 %v1016, 4294901760
    %v1018 = vsub.f32 %v1016, %v1017
    %v1019 = vand.u32 %v1018, 4294901760
    %1020 = vmatpush.msra.mxu0 %v1019
    %v1021 = vand.u32 %v895, 4294901760
    %v1022 = vsub.f32 %v895, %v1021
    %v1023 = vand.u32 %v1022, 4294901760
    %v1024 = vsub.f32 %v1022, %v1023
    %v1025 = vand.u32 %v1024, 4294901760
    %1026 = vmatpush.msra.mxu0 %v1025
    %v1027 = vand.u32 %v894, 4294901760
    %v1028 = vsub.f32 %v894, %v1027
    %v1029 = vand.u32 %v1028, 4294901760
    %v1030 = vsub.f32 %v1028, %v1029
    %v1031 = vand.u32 %v1030, 4294901760
    %1032 = vmatpush.msra.mxu0 %v1031
    %v1033 = vand.u32 %v893, 4294901760
    %v1034 = vsub.f32 %v893, %v1033
    %v1035 = vand.u32 %v1034, 4294901760
    %v1036 = vsub.f32 %v1034, %v1035
    %v1037 = vand.u32 %v1036, 4294901760
    %1038 = vmatpush.msra.mxu0 %v1037
    %v1039 = vand.u32 %v892, 4294901760
    %v1040 = vsub.f32 %v892, %v1039
    %v1041 = vand.u32 %v1040, 4294901760
    %v1042 = vsub.f32 %v1040, %v1041
    %v1043 = vand.u32 %v1042, 4294901760
    %1044 = vmatpush.msra.mxu0 %v1043
    %v1045 = vand.u32 %v891, 4294901760
    %1046 = vmatmul.f32.gmra.mxu0 %v1045
    %v1047 = vpop.f32.mrf.mxu0
    %v1048 = vadd.f32 %v947, %v1047
    %1049 = vdwg.mxu0
    %v1050 = vand.u32 %v907, 4294901760
    %v1051 = vsub.f32 %v907, %v1050
    %1052 = vmatpush.msra.mxu0 %v1051
    %v1053 = vand.u32 %v906, 4294901760
    %v1054 = vsub.f32 %v906, %v1053
    %1055 = vmatpush.msra.mxu0 %v1054
    %v1056 = vand.u32 %v905, 4294901760
    %v1057 = vsub.f32 %v905, %v1056
    %1058 = vmatpush.msra.mxu0 %v1057
    %v1059 = vand.u32 %v904, 4294901760
    %v1060 = vsub.f32 %v904, %v1059
    %1061 = vmatpush.msra.mxu0 %v1060
    %v1062 = vand.u32 %v903, 4294901760
    %v1063 = vsub.f32 %v903, %v1062
    %1064 = vmatpush.msra.mxu0 %v1063
    %v1065 = vand.u32 %v902, 4294901760
    %v1066 = vsub.f32 %v902, %v1065
    %1067 = vmatpush.msra.mxu0 %v1066
    %v1068 = vand.u32 %v901, 4294901760
    %v1069 = vsub.f32 %v901, %v1068
    %1070 = vmatpush.msra.mxu0 %v1069
    %v1071 = vand.u32 %v900, 4294901760
    %v1072 = vsub.f32 %v900, %v1071
    %1073 = vmatpush.msra.mxu0 %v1072
    %v1074 = vand.u32 %v899, 4294901760
    %v1075 = vsub.f32 %v899, %v1074
    %1076 = vmatpush.msra.mxu0 %v1075
    %v1077 = vand.u32 %v898, 4294901760
    %v1078 = vsub.f32 %v898, %v1077
    %1079 = vmatpush.msra.mxu0 %v1078
    %v1080 = vand.u32 %v897, 4294901760
    %v1081 = vsub.f32 %v897, %v1080
    %1082 = vmatpush.msra.mxu0 %v1081
    %v1083 = vand.u32 %v896, 4294901760
    %v1084 = vsub.f32 %v896, %v1083
    %1085 = vmatpush.msra.mxu0 %v1084
    %v1086 = vand.u32 %v895, 4294901760
    %v1087 = vsub.f32 %v895, %v1086
    %1088 = vmatpush.msra.mxu0 %v1087
    %v1089 = vand.u32 %v894, 4294901760
    %v1090 = vsub.f32 %v894, %v1089
    %1091 = vmatpush.msra.mxu0 %v1090
    %v1092 = vand.u32 %v893, 4294901760
    %v1093 = vsub.f32 %v893, %v1092
    %1094 = vmatpush.msra.mxu0 %v1093
    %v1095 = vand.u32 %v892, 4294901760
    %v1096 = vsub.f32 %v892, %v1095
    %1097 = vmatpush.msra.mxu0 %v1096
    %v1098 = vand.u32 %v891, 4294901760
    %v1099 = vsub.f32 %v891, %v1098
    %1100 = vmatmul.f32.gmra.mxu0 %v1099
    %v1101 = vpop.f32.mrf.mxu0
    %v1102 = vadd.f32 %v1048, %v1101
    %1103 = vdwg.mxu0
    %v1104 = vand.u32 %v907, 4294901760
    %1105 = vmatpush.msra.mxu0 %v1104
    %v1106 = vand.u32 %v906, 4294901760
    %1107 = vmatpush.msra.mxu0 %v1106
    %v1108 = vand.u32 %v905, 4294901760
    %1109 = vmatpush.msra.mxu0 %v1108
    %v1110 = vand.u32 %v904, 4294901760
    %1111 = vmatpush.msra.mxu0 %v1110
    %v1112 = vand.u32 %v903, 4294901760
    %1113 = vmatpush.msra.mxu0 %v1112
    %v1114 = vand.u32 %v902, 4294901760
    %1115 = vmatpush.msra.mxu0 %v1114
    %v1116 = vand.u32 %v901, 4294901760
    %1117 = vmatpush.msra.mxu0 %v1116
    %v1118 = vand.u32 %v900, 4294901760
    %1119 = vmatpush.msra.mxu0 %v1118
    %v1120 = vand.u32 %v899, 4294901760
    %1121 = vmatpush.msra.mxu0 %v1120
    %v1122 = vand.u32 %v898, 4294901760
    %1123 = vmatpush.msra.mxu0 %v1122
    %v1124 = vand.u32 %v897, 4294901760
    %1125 = vmatpush.msra.mxu0 %v1124
    %v1126 = vand.u32 %v896, 4294901760
    %1127 = vmatpush.msra.mxu0 %v1126
    %v1128 = vand.u32 %v895, 4294901760
    %1129 = vmatpush.msra.mxu0 %v1128
    %v1130 = vand.u32 %v894, 4294901760
    %1131 = vmatpush.msra.mxu0 %v1130
    %v1132 = vand.u32 %v893, 4294901760
    %1133 = vmatpush.msra.mxu0 %v1132
    %v1134 = vand.u32 %v892, 4294901760
    %1135 = vmatpush.msra.mxu0 %v1134
    %v1136 = vand.u32 %v891, 4294901760
    %v1137 = vsub.f32 %v891, %v1136
    %v1138 = vand.u32 %v1137, 4294901760
    %1139 = vmatmul.f32.gmra.mxu0 %v1138
    %v1140 = vpop.f32.mrf.mxu0
    %v1141 = vadd.f32 %v1102, %v1140
    %1142 = vdwg.mxu0
    %v1143 = vand.u32 %v907, 4294901760
    %v1144 = vsub.f32 %v907, %v1143
    %v1145 = vand.u32 %v1144, 4294901760
    %1146 = vmatpush.msra.mxu0 %v1145
    %v1147 = vand.u32 %v906, 4294901760
    %v1148 = vsub.f32 %v906, %v1147
    %v1149 = vand.u32 %v1148, 4294901760
    %1150 = vmatpush.msra.mxu0 %v1149
    %v1151 = vand.u32 %v905, 4294901760
    %v1152 = vsub.f32 %v905, %v1151
    %v1153 = vand.u32 %v1152, 4294901760
    %1154 = vmatpush.msra.mxu0 %v1153
    %v1155 = vand.u32 %v904, 4294901760
    %v1156 = vsub.f32 %v904, %v1155
    %v1157 = vand.u32 %v1156, 4294901760
    %1158 = vmatpush.msra.mxu0 %v1157
    %v1159 = vand.u32 %v903, 4294901760
    %v1160 = vsub.f32 %v903, %v1159
    %v1161 = vand.u32 %v1160, 4294901760
    %1162 = vmatpush.msra.mxu0 %v1161
    %v1163 = vand.u32 %v902, 4294901760
    %v1164 = vsub.f32 %v902, %v1163
    %v1165 = vand.u32 %v1164, 4294901760
    %1166 = vmatpush.msra.mxu0 %v1165
    %v1167 = vand.u32 %v901, 4294901760
    %v1168 = vsub.f32 %v901, %v1167
    %v1169 = vand.u32 %v1168, 4294901760
    %1170 = vmatpush.msra.mxu0 %v1169
    %v1171 = vand.u32 %v900, 4294901760
    %v1172 = vsub.f32 %v900, %v1171
    %v1173 = vand.u32 %v1172, 4294901760
    %1174 = vmatpush.msra.mxu0 %v1173
    %v1175 = vand.u32 %v899, 4294901760
    %v1176 = vsub.f32 %v899, %v1175
    %v1177 = vand.u32 %v1176, 4294901760
    %1178 = vmatpush.msra.mxu0 %v1177
    %v1179 = vand.u32 %v898, 4294901760
    %v1180 = vsub.f32 %v898, %v1179
    %v1181 = vand.u32 %v1180, 4294901760
    %1182 = vmatpush.msra.mxu0 %v1181
    %v1183 = vand.u32 %v897, 4294901760
    %v1184 = vsub.f32 %v897, %v1183
    %v1185 = vand.u32 %v1184, 4294901760
    %1186 = vmatpush.msra.mxu0 %v1185
    %v1187 = vand.u32 %v896, 4294901760
    %v1188 = vsub.f32 %v896, %v1187
    %v1189 = vand.u32 %v1188, 4294901760
    %1190 = vmatpush.msra.mxu0 %v1189
    %v1191 = vand.u32 %v895, 4294901760
    %v1192 = vsub.f32 %v895, %v1191
    %v1193 = vand.u32 %v1192, 4294901760
    %1194 = vmatpush.msra.mxu0 %v1193
    %v1195 = vand.u32 %v894, 4294901760
    %v1196 = vsub.f32 %v894, %v1195
    %v1197 = vand.u32 %v1196, 4294901760
    %1198 = vmatpush.msra.mxu0 %v1197
    %v1199 = vand.u32 %v893, 4294901760
    %v1200 = vsub.f32 %v893, %v1199
    %v1201 = vand.u32 %v1200, 4294901760
    %1202 = vmatpush.msra.mxu0 %v1201
    %v1203 = vand.u32 %v892, 4294901760
    %v1204 = vsub.f32 %v892, %v1203
    %v1205 = vand.u32 %v1204, 4294901760
    %1206 = vmatpush.msra.mxu0 %v1205
    %v1207 = vand.u32 %v891, 4294901760
    %1208 = vmatmul.f32.gmra.mxu0 %v1207
    %v1209 = vpop.f32.mrf.mxu0
    %v1210 = vadd.f32 %v1141, %v1209
    %1211 = vdwg.mxu0
    %v1212 = vand.u32 %v907, 4294901760
    %1213 = vmatpush.msra.mxu0 %v1212
    %v1214 = vand.u32 %v906, 4294901760
    %1215 = vmatpush.msra.mxu0 %v1214
    %v1216 = vand.u32 %v905, 4294901760
    %1217 = vmatpush.msra.mxu0 %v1216
    %v1218 = vand.u32 %v904, 4294901760
    %1219 = vmatpush.msra.mxu0 %v1218
    %v1220 = vand.u32 %v903, 4294901760
    %1221 = vmatpush.msra.mxu0 %v1220
    %v1222 = vand.u32 %v902, 4294901760
    %1223 = vmatpush.msra.mxu0 %v1222
    %v1224 = vand.u32 %v901, 4294901760
    %1225 = vmatpush.msra.mxu0 %v1224
    %v1226 = vand.u32 %v900, 4294901760
    %1227 = vmatpush.msra.mxu0 %v1226
    %v1228 = vand.u32 %v899, 4294901760
    %1229 = vmatpush.msra.mxu0 %v1228
    %v1230 = vand.u32 %v898, 4294901760
    %1231 = vmatpush.msra.mxu0 %v1230
    %v1232 = vand.u32 %v897, 4294901760
    %1233 = vmatpush.msra.mxu0 %v1232
    %v1234 = vand.u32 %v896, 4294901760
    %1235 = vmatpush.msra.mxu0 %v1234
    %v1236 = vand.u32 %v895, 4294901760
    %1237 = vmatpush.msra.mxu0 %v1236
    %v1238 = vand.u32 %v894, 4294901760
    %1239 = vmatpush.msra.mxu0 %v1238
    %v1240 = vand.u32 %v893, 4294901760
    %1241 = vmatpush.msra.mxu0 %v1240
    %v1242 = vand.u32 %v892, 4294901760
    %1243 = vmatpush.msra.mxu0 %v1242
    %v1244 = vand.u32 %v891, 4294901760
    %1245 = vmatmul.f32.gmra.mxu0 %v1244
    %v1246 = vpop.f32.mrf.mxu0
    %v1247 = vadd.f32 %v1210, %v1246
    %1248 = vdwg.mxu0
    %v1249 = vld [vmem:[#allocation2 + $0x18e] sm:$0x1]
    %v1250 = vld [vmem:[#allocation2 + $0x18f] sm:$0x1]
    %v1251 = vrot.slane %v1247, 4
    %v1252 = vadd.f32 %v1247, %v1251
    %v1253 = vrot.slane %v1252, 2
    %v1254 = vadd.f32 %v1252, %v1253
    %v1255 = vrot.slane %v1254, 1
    %v1256 = vadd.f32 %v1254, %v1255
    %v1257 = vmul.f32 %v1247, %v1247
    %v1258 = vrot.slane %v1257, 4
    %v1259 = vadd.f32 %v1257, %v1258
    %v1260 = vrot.slane %v1259, 2
    %v1261 = vadd.f32 %v1259, %v1260
    %v1262 = vrot.slane %v1261, 1
    %v1263 = vadd.f32 %v1261, %v1262
    %v1264 = vmul.f32 %v1256, 0.125
    %v1265 = vmul.f32 %v1263, 0.125
    %v1266 = vmul.f32 %v1264, %v1264
    %v1267 = vsub.f32 %v1265, %v1266
    %v1268 = vmax.f32 %v1267, 0.0
    %v1269 = vadd.f32 %v1268, 1e-05
    %v1270 = vrsqrt.pop %v1269
    %v1271 = vmul.f32 %v1270, %v1269
    %v1272 = vmul.f32 %v1271, %v1270
    %v1273 = vmul.f32 0.5, %v1272
    %v1274 = vsub.f32 1.5, %v1273
    %v1275 = vmul.f32 %v1270, %v1274
    %vm1276 = vweird.f32 %v1269
    %vm1277 = vweird.f32 %v1270
    %vm1278 = vmor %vm1276, %vm1277
    %v1279 = vsel %vm1278, %v1270, %v1275
    %v1280 = vmul.f32 %v1279, %v1249
    %v1281 = vmul.f32 %v1264, %v1280
    %v1282 = vsub.f32 %v1250, %v1281
    %v1283 = vperm.slane %v1280, 0
    %v1284 = vmul.f32 %v1247, %v1283
    %v1285 = vperm.slane %v1282, 0
    %v1286 = vadd.f32 %v1284, %v1285
    %v1287 = vld [vmem:[#allocation5] sm:$0xff]
    %v1288 = vld [vmem:[#allocation5 + $0x8] sm:$0xff]
    %v1289 = vld [vmem:[#allocation5 + $0x10] sm:$0xff]
    %v1290 = vld [vmem:[#allocation5 + $0x18] sm:$0xff]
    %v1291 = vld [vmem:[#allocation5 + $0x20] sm:$0xff]
    %v1292 = vld [vmem:[#allocation5 + $0x28] sm:$0xff]
    %v1293 = vld [vmem:[#allocation5 + $0x30] sm:$0xff]
    %v1294 = vld [vmem:[#allocation5 + $0x38] sm:$0xff]
    %v1295 = vld [vmem:[#allocation5 + $0x40] sm:$0xff]
    %v1296 = vld [vmem:[#allocation5 + $0x48] sm:$0xff]
    %v1297 = vld [vmem:[#allocation5 + $0x50] sm:$0xff]
    %v1298 = vld [vmem:[#allocation5 + $0x58] sm:$0xff]
    %v1299 = vld [vmem:[#allocation5 + $0x60] sm:$0xff]
    %v1300 = vld [vmem:[#allocation5 + $0x68] sm:$0xff]
    %v1301 = vld [vmem:[#allocation5 + $0x70] sm:$0xff]
    %v1302 = vld [vmem:[#allocation5 + $0x78] sm:$0xff]
    %v1303 = vld [vmem:[#allocation5 + $0x80] sm:$0xff]
    %v1304 = vld [vmem:[#allocation5 + $0x88] sm:$0xff]
    %v1305 = vld [vmem:[#allocation5 + $0x90] sm:$0xff]
    %v1306 = vld [vmem:[#allocation5 + $0x98] sm:$0xff]
    %v1307 = vld [vmem:[#allocation5 + $0xa0] sm:$0xff]
    %v1308 = vld [vmem:[#allocation5 + $0xa8] sm:$0xff]
    %v1309 = vld [vmem:[#allocation5 + $0xb0] sm:$0xff]
    %v1310 = vld [vmem:[#allocation5 + $0xb8] sm:$0xff]
    %v1311 = vld [vmem:[#allocation5 + $0xc0] sm:$0xff]
    %v1312 = vld [vmem:[#allocation5 + $0xc8] sm:$0xff]
    %v1313 = vld [vmem:[#allocation5 + $0xd0] sm:$0xff]
    %v1314 = vld [vmem:[#allocation5 + $0xd8] sm:$0xff]
    %v1315 = vld [vmem:[#allocation5 + $0xe0] sm:$0xff]
    %v1316 = vld [vmem:[#allocation5 + $0xe8] sm:$0xff]
    %v1317 = vld [vmem:[#allocation5 + $0xf0] sm:$0xff]
    %v1318 = vld [vmem:[#allocation5 + $0xf8] sm:$0xff]
    %v1319 = vld [vmem:[#allocation5 + $0x100] sm:$0xff]
    %v1320 = vld [vmem:[#allocation5 + $0x108] sm:$0xff]
    %v1321 = vld [vmem:[#allocation5 + $0x110] sm:$0xff]
    %v1322 = vld [vmem:[#allocation5 + $0x118] sm:$0xff]
    %v1323 = vld [vmem:[#allocation5 + $0x120] sm:$0xff]
    %v1324 = vld [vmem:[#allocation5 + $0x128] sm:$0xff]
    %v1325 = vld [vmem:[#allocation5 + $0x130] sm:$0xff]
    %v1326 = vld [vmem:[#allocation5 + $0x138] sm:$0xff]
    %v1327 = vld [vmem:[#allocation5 + $0x140] sm:$0xff]
    %v1328 = vld [vmem:[#allocation5 + $0x148] sm:$0xff]
    %v1329 = vld [vmem:[#allocation5 + $0x150] sm:$0xff]
    %v1330 = vld [vmem:[#allocation5 + $0x158] sm:$0xff]
    %v1331 = vld [vmem:[#allocation5 + $0x160] sm:$0xff]
    %v1332 = vld [vmem:[#allocation5 + $0x168] sm:$0xff]
    %v1333 = vld [vmem:[#allocation5 + $0x170] sm:$0xff]
    %v1334 = vld [vmem:[#allocation5 + $0x178] sm:$0xff]
    %s1335 = scalar_lea.vmem [#allocation5], 384
    %v1336 = vld [vmem:[%s1335] ss:$8 sm:$0x7]
    %v1338 = vperm.slane %v1336, 0
    %v1339 = vperm.slane %v1336, 1
    %v1340 = vperm.slane %v1336, 2
    %v1344 = vand.u32 %v1332, 4294901760
    %1345 = vmatpush.msra.mxu0 %v1344
    %v1346 = vand.u32 %v1329, 4294901760
    %1347 = vmatpush.msra.mxu0 %v1346
    %v1348 = vand.u32 %v1326, 4294901760
    %1349 = vmatpush.msra.mxu0 %v1348
    %v1350 = vand.u32 %v1323, 4294901760
    %1351 = vmatpush.msra.mxu0 %v1350
    %v1352 = vand.u32 %v1320, 4294901760
    %1353 = vmatpush.msra.mxu0 %v1352
    %v1354 = vand.u32 %v1317, 4294901760
    %1355 = vmatpush.msra.mxu0 %v1354
    %v1356 = vand.u32 %v1314, 4294901760
    %1357 = vmatpush.msra.mxu0 %v1356
    %v1358 = vand.u32 %v1311, 4294901760
    %1359 = vmatpush.msra.mxu0 %v1358
    %v1360 = vand.u32 %v1308, 4294901760
    %1361 = vmatpush.msra.mxu0 %v1360
    %v1362 = vand.u32 %v1305, 4294901760
    %1363 = vmatpush.msra.mxu0 %v1362
    %v1364 = vand.u32 %v1302, 4294901760
    %1365 = vmatpush.msra.mxu0 %v1364
    %v1366 = vand.u32 %v1299, 4294901760
    %1367 = vmatpush.msra.mxu0 %v1366
    %v1368 = vand.u32 %v1296, 4294901760
    %1369 = vmatpush.msra.mxu0 %v1368
    %v1370 = vand.u32 %v1293, 4294901760
    %1371 = vmatpush.msra.mxu0 %v1370
    %v1372 = vand.u32 %v1290, 4294901760
    %1373 = vmatpush.msra.mxu0 %v1372
    %v1374 = vand.u32 %v1287, 4294901760
    %1375 = vmatpush.msra.mxu0 %v1374
    %v1376 = vand.u32 %v1286, 4294901760
    %v1377 = vsub.f32 %v1286, %v1376
    %v1378 = vand.u32 %v1377, 4294901760
    %v1379 = vsub.f32 %v1377, %v1378
    %v1380 = vand.u32 %v1379, 4294901760
    %1381 = vmatmul.f32.gmra.mxu0 %v1380
    %v1382 = vpop.f32.mrf.mxu0
    %v1383 = vadd.f32 %v1338, %v1382
    %1384 = vdwg.mxu0
    %v1385 = vand.u32 %v1332, 4294901760
    %v1386 = vsub.f32 %v1332, %v1385
    %v1387 = vand.u32 %v1386, 4294901760
    %v1388 = vsub.f32 %v1386, %v1387
    %v1389 = vand.u32 %v1388, 4294901760
    %1390 = vmatpush.msra.mxu0 %v1389
    %v1391 = vand.u32 %v1329, 4294901760
    %v1392 = vsub.f32 %v1329, %v1391
    %v1393 = vand.u32 %v1392, 4294901760
    %v1394 = vsub.f32 %v1392, %v1393
    %v1395 = vand.u32 %v1394, 4294901760
    %1396 = vmatpush.msra.mxu0 %v1395
    %v1397 = vand.u32 %v1326, 4294901760
    %v1398 = vsub.f32 %v1326, %v1397
    %v1399 = vand.u32 %v1398, 4294901760
    %v1400 = vsub.f32 %v1398, %v1399
    %v1401 = vand.u32 %v1400, 4294901760
    %1402 = vmatpush.msra.mxu0 %v1401
    %v1403 = vand.u32 %v1323, 4294901760
    %v1404 = vsub.f32 %v1323, %v1403
    %v1405 = vand.u32 %v1404, 4294901760
    %v1406 = vsub.f32 %v1404, %v1405
    %v1407 = vand.u32 %v1406, 4294901760
    %1408 = vmatpush.msra.mxu0 %v1407
    %v1409 = vand.u32 %v1320, 4294901760
    %v1410 = vsub.f32 %v1320, %v1409
    %v1411 = vand.u32 %v1410, 4294901760
    %v1412 = vsub.f32 %v1410, %v1411
    %v1413 = vand.u32 %v1412, 4294901760
    %1414 = vmatpush.msra.mxu0 %v1413
    %v1415 = vand.u32 %v1317, 4294901760
    %v1416 = vsub.f32 %v1317, %v1415
    %v1417 = vand.u32 %v1416, 4294901760
    %v1418 = vsub.f32 %v1416, %v1417
    %v1419 = vand.u32 %v1418, 4294901760
    %1420 = vmatpush.msra.mxu0 %v1419
    %v1421 = vand.u32 %v1314, 4294901760
    %v1422 = vsub.f32 %v1314, %v1421
    %v1423 = vand.u32 %v1422, 4294901760
    %v1424 = vsub.f32 %v1422, %v1423
    %v1425 = vand.u32 %v1424, 4294901760
    %1426 = vmatpush.msra.mxu0 %v1425
    %v1427 = vand.u32 %v1311, 4294901760
    %v1428 = vsub.f32 %v1311, %v1427
    %v1429 = vand.u32 %v1428, 4294901760
    %v1430 = vsub.f32 %v1428, %v1429
    %v1431 = vand.u32 %v1430, 4294901760
    %1432 = vmatpush.msra.mxu0 %v1431
    %v1433 = vand.u32 %v1308, 4294901760
    %v1434 = vsub.f32 %v1308, %v1433
    %v1435 = vand.u32 %v1434, 4294901760
    %v1436 = vsub.f32 %v1434, %v1435
    %v1437 = vand.u32 %v1436, 4294901760
    %1438 = vmatpush.msra.mxu0 %v1437
    %v1439 = vand.u32 %v1305, 4294901760
    %v1440 = vsub.f32 %v1305, %v1439
    %v1441 = vand.u32 %v1440, 4294901760
    %v1442 = vsub.f32 %v1440, %v1441
    %v1443 = vand.u32 %v1442, 4294901760
    %1444 = vmatpush.msra.mxu0 %v1443
    %v1445 = vand.u32 %v1302, 4294901760
    %v1446 = vsub.f32 %v1302, %v1445
    %v1447 = vand.u32 %v1446, 4294901760
    %v1448 = vsub.f32 %v1446, %v1447
    %v1449 = vand.u32 %v1448, 4294901760
    %1450 = vmatpush.msra.mxu0 %v1449
    %v1451 = vand.u32 %v1299, 4294901760
    %v1452 = vsub.f32 %v1299, %v1451
    %v1453 = vand.u32 %v1452, 4294901760
    %v1454 = vsub.f32 %v1452, %v1453
    %v1455 = vand.u32 %v1454, 4294901760
    %1456 = vmatpush.msra.mxu0 %v1455
    %v1457 = vand.u32 %v1296, 4294901760
    %v1458 = vsub.f32 %v1296, %v1457
    %v1459 = vand.u32 %v1458, 4294901760
    %v1460 = vsub.f32 %v1458, %v1459
    %v1461 = vand.u32 %v1460, 4294901760
    %1462 = vmatpush.msra.mxu0 %v1461
    %v1463 = vand.u32 %v1293, 4294901760
    %v1464 = vsub.f32 %v1293, %v1463
    %v1465 = vand.u32 %v1464, 4294901760
    %v1466 = vsub.f32 %v1464, %v1465
    %v1467 = vand.u32 %v1466, 4294901760
    %1468 = vmatpush.msra.mxu0 %v1467
    %v1469 = vand.u32 %v1290, 4294901760
    %v1470 = vsub.f32 %v1290, %v1469
    %v1471 = vand.u32 %v1470, 4294901760
    %v1472 = vsub.f32 %v1470, %v1471
    %v1473 = vand.u32 %v1472, 4294901760
    %1474 = vmatpush.msra.mxu0 %v1473
    %v1475 = vand.u32 %v1287, 4294901760
    %v1476 = vsub.f32 %v1287, %v1475
    %v1477 = vand.u32 %v1476, 4294901760
    %v1478 = vsub.f32 %v1476, %v1477
    %v1479 = vand.u32 %v1478, 4294901760
    %1480 = vmatpush.msra.mxu0 %v1479
    %v1481 = vand.u32 %v1286, 4294901760
    %1482 = vmatmul.f32.gmra.mxu0 %v1481
    %v1483 = vpop.f32.mrf.mxu0
    %v1484 = vadd.f32 %v1383, %v1483
    %1485 = vdwg.mxu0
    %v1486 = vand.u32 %v1332, 4294901760
    %v1487 = vsub.f32 %v1332, %v1486
    %1488 = vmatpush.msra.mxu0 %v1487
    %v1489 = vand.u32 %v1329, 4294901760
    %v1490 = vsub.f32 %v1329, %v1489
    %1491 = vmatpush.msra.mxu0 %v1490
    %v1492 = vand.u32 %v1326, 4294901760
    %v1493 = vsub.f32 %v1326, %v1492
    %1494 = vmatpush.msra.mxu0 %v1493
    %v1495 = vand.u32 %v1323, 4294901760
    %v1496 = vsub.f32 %v1323, %v1495
    %1497 = vmatpush.msra.mxu0 %v1496
    %v1498 = vand.u32 %v1320, 4294901760
    %v1499 = vsub.f32 %v1320, %v1498
    %1500 = vmatpush.msra.mxu0 %v1499
    %v1501 = vand.u32 %v1317, 4294901760
    %v1502 = vsub.f32 %v1317, %v1501
    %1503 = vmatpush.msra.mxu0 %v1502
    %v1504 = vand.u32 %v1314, 4294901760
    %v1505 = vsub.f32 %v1314, %v1504
    %1506 = vmatpush.msra.mxu0 %v1505
    %v1507 = vand.u32 %v1311, 4294901760
    %v1508 = vsub.f32 %v1311, %v1507
    %1509 = vmatpush.msra.mxu0 %v1508
    %v1510 = vand.u32 %v1308, 4294901760
    %v1511 = vsub.f32 %v1308, %v1510
    %1512 = vmatpush.msra.mxu0 %v1511
    %v1513 = vand.u32 %v1305, 4294901760
    %v1514 = vsub.f32 %v1305, %v1513
    %1515 = vmatpush.msra.mxu0 %v1514
    %v1516 = vand.u32 %v1302, 4294901760
    %v1517 = vsub.f32 %v1302, %v1516
    %1518 = vmatpush.msra.mxu0 %v1517
    %v1519 = vand.u32 %v1299, 4294901760
    %v1520 = vsub.f32 %v1299, %v1519
    %1521 = vmatpush.msra.mxu0 %v1520
    %v1522 = vand.u32 %v1296, 4294901760
    %v1523 = vsub.f32 %v1296, %v1522
    %1524 = vmatpush.msra.mxu0 %v1523
    %v1525 = vand.u32 %v1293, 4294901760
    %v1526 = vsub.f32 %v1293, %v1525
    %1527 = vmatpush.msra.mxu0 %v1526
    %v1528 = vand.u32 %v1290, 4294901760
    %v1529 = vsub.f32 %v1290, %v1528
    %1530 = vmatpush.msra.mxu0 %v1529
    %v1531 = vand.u32 %v1287, 4294901760
    %v1532 = vsub.f32 %v1287, %v1531
    %1533 = vmatpush.msra.mxu0 %v1532
    %v1534 = vand.u32 %v1286, 4294901760
    %v1535 = vsub.f32 %v1286, %v1534
    %1536 = vmatmul.f32.gmra.mxu0 %v1535
    %v1537 = vpop.f32.mrf.mxu0
    %v1538 = vadd.f32 %v1484, %v1537
    %1539 = vdwg.mxu0
    %v1540 = vand.u32 %v1332, 4294901760
    %1541 = vmatpush.msra.mxu0 %v1540
    %v1542 = vand.u32 %v1329, 4294901760
    %1543 = vmatpush.msra.mxu0 %v1542
    %v1544 = vand.u32 %v1326, 4294901760
    %1545 = vmatpush.msra.mxu0 %v1544
    %v1546 = vand.u32 %v1323, 4294901760
    %1547 = vmatpush.msra.mxu0 %v1546
    %v1548 = vand.u32 %v1320, 4294901760
    %1549 = vmatpush.msra.mxu0 %v1548
    %v1550 = vand.u32 %v1317, 4294901760
    %1551 = vmatpush.msra.mxu0 %v1550
    %v1552 = vand.u32 %v1314, 4294901760
    %1553 = vmatpush.msra.mxu0 %v1552
    %v1554 = vand.u32 %v1311, 4294901760
    %1555 = vmatpush.msra.mxu0 %v1554
    %v1556 = vand.u32 %v1308, 4294901760
    %1557 = vmatpush.msra.mxu0 %v1556
    %v1558 = vand.u32 %v1305, 4294901760
    %1559 = vmatpush.msra.mxu0 %v1558
    %v1560 = vand.u32 %v1302, 4294901760
    %1561 = vmatpush.msra.mxu0 %v1560
    %v1562 = vand.u32 %v1299, 4294901760
    %1563 = vmatpush.msra.mxu0 %v1562
    %v1564 = vand.u32 %v1296, 4294901760
    %1565 = vmatpush.msra.mxu0 %v1564
    %v1566 = vand.u32 %v1293, 4294901760
    %1567 = vmatpush.msra.mxu0 %v1566
    %v1568 = vand.u32 %v1290, 4294901760
    %1569 = vmatpush.msra.mxu0 %v1568
    %v1570 = vand.u32 %v1287, 4294901760
    %1571 = vmatpush.msra.mxu0 %v1570
    %v1572 = vand.u32 %v1286, 4294901760
    %v1573 = vsub.f32 %v1286, %v1572
    %v1574 = vand.u32 %v1573, 4294901760
    %1575 = vmatmul.f32.gmra.mxu0 %v1574
    %v1576 = vpop.f32.mrf.mxu0
    %v1577 = vadd.f32 %v1538, %v1576
    %1578 = vdwg.mxu0
    %v1579 = vand.u32 %v1332, 4294901760
    %v1580 = vsub.f32 %v1332, %v1579
    %v1581 = vand.u32 %v1580, 4294901760
    %1582 = vmatpush.msra.mxu0 %v1581
    %v1583 = vand.u32 %v1329, 4294901760
    %v1584 = vsub.f32 %v1329, %v1583
    %v1585 = vand.u32 %v1584, 4294901760
    %1586 = vmatpush.msra.mxu0 %v1585
    %v1587 = vand.u32 %v1326, 4294901760
    %v1588 = vsub.f32 %v1326, %v1587
    %v1589 = vand.u32 %v1588, 4294901760
    %1590 = vmatpush.msra.mxu0 %v1589
    %v1591 = vand.u32 %v1323, 4294901760
    %v1592 = vsub.f32 %v1323, %v1591
    %v1593 = vand.u32 %v1592, 4294901760
    %1594 = vmatpush.msra.mxu0 %v1593
    %v1595 = vand.u32 %v1320, 4294901760
    %v1596 = vsub.f32 %v1320, %v1595
    %v1597 = vand.u32 %v1596, 4294901760
    %1598 = vmatpush.msra.mxu0 %v1597
    %v1599 = vand.u32 %v1317, 4294901760
    %v1600 = vsub.f32 %v1317, %v1599
    %v1601 = vand.u32 %v1600, 4294901760
    %1602 = vmatpush.msra.mxu0 %v1601
    %v1603 = vand.u32 %v1314, 4294901760
    %v1604 = vsub.f32 %v1314, %v1603
    %v1605 = vand.u32 %v1604, 4294901760
    %1606 = vmatpush.msra.mxu0 %v1605
    %v1607 = vand.u32 %v1311, 4294901760
    %v1608 = vsub.f32 %v1311, %v1607
    %v1609 = vand.u32 %v1608, 4294901760
    %1610 = vmatpush.msra.mxu0 %v1609
    %v1611 = vand.u32 %v1308, 4294901760
    %v1612 = vsub.f32 %v1308, %v1611
    %v1613 = vand.u32 %v1612, 4294901760
    %1614 = vmatpush.msra.mxu0 %v1613
    %v1615 = vand.u32 %v1305, 4294901760
    %v1616 = vsub.f32 %v1305, %v1615
    %v1617 = vand.u32 %v1616, 4294901760
    %1618 = vmatpush.msra.mxu0 %v1617
    %v1619 = vand.u32 %v1302, 4294901760
    %v1620 = vsub.f32 %v1302, %v1619
    %v1621 = vand.u32 %v1620, 4294901760
    %1622 = vmatpush.msra.mxu0 %v1621
    %v1623 = vand.u32 %v1299, 4294901760
    %v1624 = vsub.f32 %v1299, %v1623
    %v1625 = vand.u32 %v1624, 4294901760
    %1626 = vmatpush.msra.mxu0 %v1625
    %v1627 = vand.u32 %v1296, 4294901760
    %v1628 = vsub.f32 %v1296, %v1627
    %v1629 = vand.u32 %v1628, 4294901760
    %1630 = vmatpush.msra.mxu0 %v1629
    %v1631 = vand.u32 %v1293, 4294901760
    %v1632 = vsub.f32 %v1293, %v1631
    %v1633 = vand.u32 %v1632, 4294901760
    %1634 = vmatpush.msra.mxu0 %v1633
    %v1635 = vand.u32 %v1290, 4294901760
    %v1636 = vsub.f32 %v1290, %v1635
    %v1637 = vand.u32 %v1636, 4294901760
    %1638 = vmatpush.msra.mxu0 %v1637
    %v1639 = vand.u32 %v1287, 4294901760
    %v1640 = vsub.f32 %v1287, %v1639
    %v1641 = vand.u32 %v1640, 4294901760
    %1642 = vmatpush.msra.mxu0 %v1641
    %v1643 = vand.u32 %v1286, 4294901760
    %1644 = vmatmul.f32.gmra.mxu0 %v1643
    %v1645 = vpop.f32.mrf.mxu0
    %v1646 = vadd.f32 %v1577, %v1645
    %1647 = vdwg.mxu0
    %v1648 = vand.u32 %v1332, 4294901760
    %1649 = vmatpush.msra.mxu0 %v1648
    %v1650 = vand.u32 %v1329, 4294901760
    %1651 = vmatpush.msra.mxu0 %v1650
    %v1652 = vand.u32 %v1326, 4294901760
    %1653 = vmatpush.msra.mxu0 %v1652
    %v1654 = vand.u32 %v1323, 4294901760
    %1655 = vmatpush.msra.mxu0 %v1654
    %v1656 = vand.u32 %v1320, 4294901760
    %1657 = vmatpush.msra.mxu0 %v1656
    %v1658 = vand.u32 %v1317, 4294901760
    %1659 = vmatpush.msra.mxu0 %v1658
    %v1660 = vand.u32 %v1314, 4294901760
    %1661 = vmatpush.msra.mxu0 %v1660
    %v1662 = vand.u32 %v1311, 4294901760
    %1663 = vmatpush.msra.mxu0 %v1662
    %v1664 = vand.u32 %v1308, 4294901760
    %1665 = vmatpush.msra.mxu0 %v1664
    %v1666 = vand.u32 %v1305, 4294901760
    %1667 = vmatpush.msra.mxu0 %v1666
    %v1668 = vand.u32 %v1302, 4294901760
    %1669 = vmatpush.msra.mxu0 %v1668
    %v1670 = vand.u32 %v1299, 4294901760
    %1671 = vmatpush.msra.mxu0 %v1670
    %v1672 = vand.u32 %v1296, 4294901760
    %1673 = vmatpush.msra.mxu0 %v1672
    %v1674 = vand.u32 %v1293, 4294901760
    %1675 = vmatpush.msra.mxu0 %v1674
    %v1676 = vand.u32 %v1290, 4294901760
    %1677 = vmatpush.msra.mxu0 %v1676
    %v1678 = vand.u32 %v1287, 4294901760
    %1679 = vmatpush.msra.mxu0 %v1678
    %v1680 = vand.u32 %v1286, 4294901760
    %1681 = vmatmul.f32.gmra.mxu0 %v1680
    %v1682 = vpop.f32.mrf.mxu0
    %v1683 = vadd.f32 %v1646, %v1682
    %1684 = vdwg.mxu0
    %v1685 = vand.u32 %v1333, 4294901760
    %1686 = vmatpush.msra.mxu0 %v1685
    %v1687 = vand.u32 %v1330, 4294901760
    %1688 = vmatpush.msra.mxu0 %v1687
    %v1689 = vand.u32 %v1327, 4294901760
    %1690 = vmatpush.msra.mxu0 %v1689
    %v1691 = vand.u32 %v1324, 4294901760
    %1692 = vmatpush.msra.mxu0 %v1691
    %v1693 = vand.u32 %v1321, 4294901760
    %1694 = vmatpush.msra.mxu0 %v1693
    %v1695 = vand.u32 %v1318, 4294901760
    %1696 = vmatpush.msra.mxu0 %v1695
    %v1697 = vand.u32 %v1315, 4294901760
    %1698 = vmatpush.msra.mxu0 %v1697
    %v1699 = vand.u32 %v1312, 4294901760
    %1700 = vmatpush.msra.mxu0 %v1699
    %v1701 = vand.u32 %v1309, 4294901760
    %1702 = vmatpush.msra.mxu0 %v1701
    %v1703 = vand.u32 %v1306, 4294901760
    %1704 = vmatpush.msra.mxu0 %v1703
    %v1705 = vand.u32 %v1303, 4294901760
    %1706 = vmatpush.msra.mxu0 %v1705
    %v1707 = vand.u32 %v1300, 4294901760
    %1708 = vmatpush.msra.mxu0 %v1707
    %v1709 = vand.u32 %v1297, 4294901760
    %1710 = vmatpush.msra.mxu0 %v1709
    %v1711 = vand.u32 %v1294, 4294901760
    %1712 = vmatpush.msra.mxu0 %v1711
    %v1713 = vand.u32 %v1291, 4294901760
    %1714 = vmatpush.msra.mxu0 %v1713
    %v1715 = vand.u32 %v1288, 4294901760
    %1716 = vmatpush.msra.mxu0 %v1715
    %v1717 = vand.u32 %v1286, 4294901760
    %v1718 = vsub.f32 %v1286, %v1717
    %v1719 = vand.u32 %v1718, 4294901760
    %v1720 = vsub.f32 %v1718, %v1719
    %v1721 = vand.u32 %v1720, 4294901760
    %1722 = vmatmul.f32.gmra.mxu0 %v1721
    %v1723 = vpop.f32.mrf.mxu0
    %v1724 = vadd.f32 %v1339, %v1723
    %1725 = vdwg.mxu0
    %v1726 = vand.u32 %v1333, 4294901760
    %v1727 = vsub.f32 %v1333, %v1726
    %v1728 = vand.u32 %v1727, 4294901760
    %v1729 = vsub.f32 %v1727, %v1728
    %v1730 = vand.u32 %v1729, 4294901760
    %1731 = vmatpush.msra.mxu0 %v1730
    %v1732 = vand.u32 %v1330, 4294901760
    %v1733 = vsub.f32 %v1330, %v1732
    %v1734 = vand.u32 %v1733, 4294901760
    %v1735 = vsub.f32 %v1733, %v1734
    %v1736 = vand.u32 %v1735, 4294901760
    %1737 = vmatpush.msra.mxu0 %v1736
    %v1738 = vand.u32 %v1327, 4294901760
    %v1739 = vsub.f32 %v1327, %v1738
    %v1740 = vand.u32 %v1739, 4294901760
    %v1741 = vsub.f32 %v1739, %v1740
    %v1742 = vand.u32 %v1741, 4294901760
    %1743 = vmatpush.msra.mxu0 %v1742
    %v1744 = vand.u32 %v1324, 4294901760
    %v1745 = vsub.f32 %v1324, %v1744
    %v1746 = vand.u32 %v1745, 4294901760
    %v1747 = vsub.f32 %v1745, %v1746
    %v1748 = vand.u32 %v1747, 4294901760
    %1749 = vmatpush.msra.mxu0 %v1748
    %v1750 = vand.u32 %v1321, 4294901760
    %v1751 = vsub.f32 %v1321, %v1750
    %v1752 = vand.u32 %v1751, 4294901760
    %v1753 = vsub.f32 %v1751, %v1752
    %v1754 = vand.u32 %v1753, 4294901760
    %1755 = vmatpush.msra.mxu0 %v1754
    %v1756 = vand.u32 %v1318, 4294901760
    %v1757 = vsub.f32 %v1318, %v1756
    %v1758 = vand.u32 %v1757, 4294901760
    %v1759 = vsub.f32 %v1757, %v1758
    %v1760 = vand.u32 %v1759, 4294901760
    %1761 = vmatpush.msra.mxu0 %v1760
    %v1762 = vand.u32 %v1315, 4294901760
    %v1763 = vsub.f32 %v1315, %v1762
    %v1764 = vand.u32 %v1763, 4294901760
    %v1765 = vsub.f32 %v1763, %v1764
    %v1766 = vand.u32 %v1765, 4294901760
    %1767 = vmatpush.msra.mxu0 %v1766
    %v1768 = vand.u32 %v1312, 4294901760
    %v1769 = vsub.f32 %v1312, %v1768
    %v1770 = vand.u32 %v1769, 4294901760
    %v1771 = vsub.f32 %v1769, %v1770
    %v1772 = vand.u32 %v1771, 4294901760
    %1773 = vmatpush.msra.mxu0 %v1772
    %v1774 = vand.u32 %v1309, 4294901760
    %v1775 = vsub.f32 %v1309, %v1774
    %v1776 = vand.u32 %v1775, 4294901760
    %v1777 = vsub.f32 %v1775, %v1776
    %v1778 = vand.u32 %v1777, 4294901760
    %1779 = vmatpush.msra.mxu0 %v1778
    %v1780 = vand.u32 %v1306, 4294901760
    %v1781 = vsub.f32 %v1306, %v1780
    %v1782 = vand.u32 %v1781, 4294901760
    %v1783 = vsub.f32 %v1781, %v1782
    %v1784 = vand.u32 %v1783, 4294901760
    %1785 = vmatpush.msra.mxu0 %v1784
    %v1786 = vand.u32 %v1303, 4294901760
    %v1787 = vsub.f32 %v1303, %v1786
    %v1788 = vand.u32 %v1787, 4294901760
    %v1789 = vsub.f32 %v1787, %v1788
    %v1790 = vand.u32 %v1789, 4294901760
    %1791 = vmatpush.msra.mxu0 %v1790
    %v1792 = vand.u32 %v1300, 4294901760
    %v1793 = vsub.f32 %v1300, %v1792
    %v1794 = vand.u32 %v1793, 4294901760
    %v1795 = vsub.f32 %v1793, %v1794
    %v1796 = vand.u32 %v1795, 4294901760
    %1797 = vmatpush.msra.mxu0 %v1796
    %v1798 = vand.u32 %v1297, 4294901760
    %v1799 = vsub.f32 %v1297, %v1798
    %v1800 = vand.u32 %v1799, 4294901760
    %v1801 = vsub.f32 %v1799, %v1800
    %v1802 = vand.u32 %v1801, 4294901760
    %1803 = vmatpush.msra.mxu0 %v1802
    %v1804 = vand.u32 %v1294, 4294901760
    %v1805 = vsub.f32 %v1294, %v1804
    %v1806 = vand.u32 %v1805, 4294901760
    %v1807 = vsub.f32 %v1805, %v1806
    %v1808 = vand.u32 %v1807, 4294901760
    %1809 = vmatpush.msra.mxu0 %v1808
    %v1810 = vand.u32 %v1291, 4294901760
    %v1811 = vsub.f32 %v1291, %v1810
    %v1812 = vand.u32 %v1811, 4294901760
    %v1813 = vsub.f32 %v1811, %v1812
    %v1814 = vand.u32 %v1813, 4294901760
    %1815 = vmatpush.msra.mxu0 %v1814
    %v1816 = vand.u32 %v1288, 4294901760
    %v1817 = vsub.f32 %v1288, %v1816
    %v1818 = vand.u32 %v1817, 4294901760
    %v1819 = vsub.f32 %v1817, %v1818
    %v1820 = vand.u32 %v1819, 4294901760
    %1821 = vmatpush.msra.mxu0 %v1820
    %v1822 = vand.u32 %v1286, 4294901760
    %1823 = vmatmul.f32.gmra.mxu0 %v1822
    %v1824 = vpop.f32.mrf.mxu0
    %v1825 = vadd.f32 %v1724, %v1824
    %1826 = vdwg.mxu0
    %v1827 = vand.u32 %v1333, 4294901760
    %v1828 = vsub.f32 %v1333, %v1827
    %1829 = vmatpush.msra.mxu0 %v1828
    %v1830 = vand.u32 %v1330, 4294901760
    %v1831 = vsub.f32 %v1330, %v1830
    %1832 = vmatpush.msra.mxu0 %v1831
    %v1833 = vand.u32 %v1327, 4294901760
    %v1834 = vsub.f32 %v1327, %v1833
    %1835 = vmatpush.msra.mxu0 %v1834
    %v1836 = vand.u32 %v1324, 4294901760
    %v1837 = vsub.f32 %v1324, %v1836
    %1838 = vmatpush.msra.mxu0 %v1837
    %v1839 = vand.u32 %v1321, 4294901760
    %v1840 = vsub.f32 %v1321, %v1839
    %1841 = vmatpush.msra.mxu0 %v1840
    %v1842 = vand.u32 %v1318, 4294901760
    %v1843 = vsub.f32 %v1318, %v1842
    %1844 = vmatpush.msra.mxu0 %v1843
    %v1845 = vand.u32 %v1315, 4294901760
    %v1846 = vsub.f32 %v1315, %v1845
    %1847 = vmatpush.msra.mxu0 %v1846
    %v1848 = vand.u32 %v1312, 4294901760
    %v1849 = vsub.f32 %v1312, %v1848
    %1850 = vmatpush.msra.mxu0 %v1849
    %v1851 = vand.u32 %v1309, 4294901760
    %v1852 = vsub.f32 %v1309, %v1851
    %1853 = vmatpush.msra.mxu0 %v1852
    %v1854 = vand.u32 %v1306, 4294901760
    %v1855 = vsub.f32 %v1306, %v1854
    %1856 = vmatpush.msra.mxu0 %v1855
    %v1857 = vand.u32 %v1303, 4294901760
    %v1858 = vsub.f32 %v1303, %v1857
    %1859 = vmatpush.msra.mxu0 %v1858
    %v1860 = vand.u32 %v1300, 4294901760
    %v1861 = vsub.f32 %v1300, %v1860
    %1862 = vmatpush.msra.mxu0 %v1861
    %v1863 = vand.u32 %v1297, 4294901760
    %v1864 = vsub.f32 %v1297, %v1863
    %1865 = vmatpush.msra.mxu0 %v1864
    %v1866 = vand.u32 %v1294, 4294901760
    %v1867 = vsub.f32 %v1294, %v1866
    %1868 = vmatpush.msra.mxu0 %v1867
    %v1869 = vand.u32 %v1291, 4294901760
    %v1870 = vsub.f32 %v1291, %v1869
    %1871 = vmatpush.msra.mxu0 %v1870
    %v1872 = vand.u32 %v1288, 4294901760
    %v1873 = vsub.f32 %v1288, %v1872
    %1874 = vmatpush.msra.mxu0 %v1873
    %v1875 = vand.u32 %v1286, 4294901760
    %v1876 = vsub.f32 %v1286, %v1875
    %1877 = vmatmul.f32.gmra.mxu0 %v1876
    %v1878 = vpop.f32.mrf.mxu0
    %v1879 = vadd.f32 %v1825, %v1878
    %1880 = vdwg.mxu0
    %v1881 = vand.u32 %v1333, 4294901760
    %1882 = vmatpush.msra.mxu0 %v1881
    %v1883 = vand.u32 %v1330, 4294901760
    %1884 = vmatpush.msra.mxu0 %v1883
    %v1885 = vand.u32 %v1327, 4294901760
    %1886 = vmatpush.msra.mxu0 %v1885
    %v1887 = vand.u32 %v1324, 4294901760
    %1888 = vmatpush.msra.mxu0 %v1887
    %v1889 = vand.u32 %v1321, 4294901760
    %1890 = vmatpush.msra.mxu0 %v1889
    %v1891 = vand.u32 %v1318, 4294901760
    %1892 = vmatpush.msra.mxu0 %v1891
    %v1893 = vand.u32 %v1315, 4294901760
    %1894 = vmatpush.msra.mxu0 %v1893
    %v1895 = vand.u32 %v1312, 4294901760
    %1896 = vmatpush.msra.mxu0 %v1895
    %v1897 = vand.u32 %v1309, 4294901760
    %1898 = vmatpush.msra.mxu0 %v1897
    %v1899 = vand.u32 %v1306, 4294901760
    %1900 = vmatpush.msra.mxu0 %v1899
    %v1901 = vand.u32 %v1303, 4294901760
    %1902 = vmatpush.msra.mxu0 %v1901
    %v1903 = vand.u32 %v1300, 4294901760
    %1904 = vmatpush.msra.mxu0 %v1903
    %v1905 = vand.u32 %v1297, 4294901760
    %1906 = vmatpush.msra.mxu0 %v1905
    %v1907 = vand.u32 %v1294, 4294901760
    %1908 = vmatpush.msra.mxu0 %v1907
    %v1909 = vand.u32 %v1291, 4294901760
    %1910 = vmatpush.msra.mxu0 %v1909
    %v1911 = vand.u32 %v1288, 4294901760
    %1912 = vmatpush.msra.mxu0 %v1911
    %v1913 = vand.u32 %v1286, 4294901760
    %v1914 = vsub.f32 %v1286, %v1913
    %v1915 = vand.u32 %v1914, 4294901760
    %1916 = vmatmul.f32.gmra.mxu0 %v1915
    %v1917 = vpop.f32.mrf.mxu0
    %v1918 = vadd.f32 %v1879, %v1917
    %1919 = vdwg.mxu0
    %v1920 = vand.u32 %v1333, 4294901760
    %v1921 = vsub.f32 %v1333, %v1920
    %v1922 = vand.u32 %v1921, 4294901760
    %1923 = vmatpush.msra.mxu0 %v1922
    %v1924 = vand.u32 %v1330, 4294901760
    %v1925 = vsub.f32 %v1330, %v1924
    %v1926 = vand.u32 %v1925, 4294901760
    %1927 = vmatpush.msra.mxu0 %v1926
    %v1928 = vand.u32 %v1327, 4294901760
    %v1929 = vsub.f32 %v1327, %v1928
    %v1930 = vand.u32 %v1929, 4294901760
    %1931 = vmatpush.msra.mxu0 %v1930
    %v1932 = vand.u32 %v1324, 4294901760
    %v1933 = vsub.f32 %v1324, %v1932
    %v1934 = vand.u32 %v1933, 4294901760
    %1935 = vmatpush.msra.mxu0 %v1934
    %v1936 = vand.u32 %v1321, 4294901760
    %v1937 = vsub.f32 %v1321, %v1936
    %v1938 = vand.u32 %v1937, 4294901760
    %1939 = vmatpush.msra.mxu0 %v1938
    %v1940 = vand.u32 %v1318, 4294901760
    %v1941 = vsub.f32 %v1318, %v1940
    %v1942 = vand.u32 %v1941, 4294901760
    %1943 = vmatpush.msra.mxu0 %v1942
    %v1944 = vand.u32 %v1315, 4294901760
    %v1945 = vsub.f32 %v1315, %v1944
    %v1946 = vand.u32 %v1945, 4294901760
    %1947 = vmatpush.msra.mxu0 %v1946
    %v1948 = vand.u32 %v1312, 4294901760
    %v1949 = vsub.f32 %v1312, %v1948
    %v1950 = vand.u32 %v1949, 4294901760
    %1951 = vmatpush.msra.mxu0 %v1950
    %v1952 = vand.u32 %v1309, 4294901760
    %v1953 = vsub.f32 %v1309, %v1952
    %v1954 = vand.u32 %v1953, 4294901760
    %1955 = vmatpush.msra.mxu0 %v1954
    %v1956 = vand.u32 %v1306, 4294901760
    %v1957 = vsub.f32 %v1306, %v1956
    %v1958 = vand.u32 %v1957, 4294901760
    %1959 = vmatpush.msra.mxu0 %v1958
    %v1960 = vand.u32 %v1303, 4294901760
    %v1961 = vsub.f32 %v1303, %v1960
    %v1962 = vand.u32 %v1961, 4294901760
    %1963 = vmatpush.msra.mxu0 %v1962
    %v1964 = vand.u32 %v1300, 4294901760
    %v1965 = vsub.f32 %v1300, %v1964
    %v1966 = vand.u32 %v1965, 4294901760
    %1967 = vmatpush.msra.mxu0 %v1966
    %v1968 = vand.u32 %v1297, 4294901760
    %v1969 = vsub.f32 %v1297, %v1968
    %v1970 = vand.u32 %v1969, 4294901760
    %1971 = vmatpush.msra.mxu0 %v1970
    %v1972 = vand.u32 %v1294, 4294901760
    %v1973 = vsub.f32 %v1294, %v1972
    %v1974 = vand.u32 %v1973, 4294901760
    %1975 = vmatpush.msra.mxu0 %v1974
    %v1976 = vand.u32 %v1291, 4294901760
    %v1977 = vsub.f32 %v1291, %v1976
    %v1978 = vand.u32 %v1977, 4294901760
    %1979 = vmatpush.msra.mxu0 %v1978
    %v1980 = vand.u32 %v1288, 4294901760
    %v1981 = vsub.f32 %v1288, %v1980
    %v1982 = vand.u32 %v1981, 4294901760
    %1983 = vmatpush.msra.mxu0 %v1982
    %v1984 = vand.u32 %v1286, 4294901760
    %1985 = vmatmul.f32.gmra.mxu0 %v1984
    %v1986 = vpop.f32.mrf.mxu0
    %v1987 = vadd.f32 %v1918, %v1986
    %1988 = vdwg.mxu0
    %v1989 = vand.u32 %v1333, 4294901760
    %1990 = vmatpush.msra.mxu0 %v1989
    %v1991 = vand.u32 %v1330, 4294901760
    %1992 = vmatpush.msra.mxu0 %v1991
    %v1993 = vand.u32 %v1327, 4294901760
    %1994 = vmatpush.msra.mxu0 %v1993
    %v1995 = vand.u32 %v1324, 4294901760
    %1996 = vmatpush.msra.mxu0 %v1995
    %v1997 = vand.u32 %v1321, 4294901760
    %1998 = vmatpush.msra.mxu0 %v1997
    %v1999 = vand.u32 %v1318, 4294901760
    %2000 = vmatpush.msra.mxu0 %v1999
    %v2001 = vand.u32 %v1315, 4294901760
    %2002 = vmatpush.msra.mxu0 %v2001
    %v2003 = vand.u32 %v1312, 4294901760
    %2004 = vmatpush.msra.mxu0 %v2003
    %v2005 = vand.u32 %v1309, 4294901760
    %2006 = vmatpush.msra.mxu0 %v2005
    %v2007 = vand.u32 %v1306, 4294901760
    %2008 = vmatpush.msra.mxu0 %v2007
    %v2009 = vand.u32 %v1303, 4294901760
    %2010 = vmatpush.msra.mxu0 %v2009
    %v2011 = vand.u32 %v1300, 4294901760
    %2012 = vmatpush.msra.mxu0 %v2011
    %v2013 = vand.u32 %v1297, 4294901760
    %2014 = vmatpush.msra.mxu0 %v2013
    %v2015 = vand.u32 %v1294, 4294901760
    %2016 = vmatpush.msra.mxu0 %v2015
    %v2017 = vand.u32 %v1291, 4294901760
    %2018 = vmatpush.msra.mxu0 %v2017
    %v2019 = vand.u32 %v1288, 4294901760
    %2020 = vmatpush.msra.mxu0 %v2019
    %v2021 = vand.u32 %v1286, 4294901760
    %2022 = vmatmul.f32.gmra.mxu0 %v2021
    %v2023 = vpop.f32.mrf.mxu0
    %v2024 = vadd.f32 %v1987, %v2023
    %2025 = vdwg.mxu0
    %v2026 = vand.u32 %v1334, 4294901760
    %2027 = vmatpush.msra.mxu0 %v2026
    %v2028 = vand.u32 %v1331, 4294901760
    %2029 = vmatpush.msra.mxu0 %v2028
    %v2030 = vand.u32 %v1328, 4294901760
    %2031 = vmatpush.msra.mxu0 %v2030
    %v2032 = vand.u32 %v1325, 4294901760
    %2033 = vmatpush.msra.mxu0 %v2032
    %v2034 = vand.u32 %v1322, 4294901760
    %2035 = vmatpush.msra.mxu0 %v2034
    %v2036 = vand.u32 %v1319, 4294901760
    %2037 = vmatpush.msra.mxu0 %v2036
    %v2038 = vand.u32 %v1316, 4294901760
    %2039 = vmatpush.msra.mxu0 %v2038
    %v2040 = vand.u32 %v1313, 4294901760
    %2041 = vmatpush.msra.mxu0 %v2040
    %v2042 = vand.u32 %v1310, 4294901760
    %2043 = vmatpush.msra.mxu0 %v2042
    %v2044 = vand.u32 %v1307, 4294901760
    %2045 = vmatpush.msra.mxu0 %v2044
    %v2046 = vand.u32 %v1304, 4294901760
    %2047 = vmatpush.msra.mxu0 %v2046
    %v2048 = vand.u32 %v1301, 4294901760
    %2049 = vmatpush.msra.mxu0 %v2048
    %v2050 = vand.u32 %v1298, 4294901760
    %2051 = vmatpush.msra.mxu0 %v2050
    %v2052 = vand.u32 %v1295, 4294901760
    %2053 = vmatpush.msra.mxu0 %v2052
    %v2054 = vand.u32 %v1292, 4294901760
    %2055 = vmatpush.msra.mxu0 %v2054
    %v2056 = vand.u32 %v1289, 4294901760
    %2057 = vmatpush.msra.mxu0 %v2056
    %v2058 = vand.u32 %v1286, 4294901760
    %v2059 = vsub.f32 %v1286, %v2058
    %v2060 = vand.u32 %v2059, 4294901760
    %v2061 = vsub.f32 %v2059, %v2060
    %v2062 = vand.u32 %v2061, 4294901760
    %2063 = vmatmul.f32.gmra.mxu0 %v2062
    %v2064 = vpop.f32.mrf.mxu0
    %v2065 = vadd.f32 %v1340, %v2064
    %2066 = vdwg.mxu0
    %v2067 = vand.u32 %v1334, 4294901760
    %v2068 = vsub.f32 %v1334, %v2067
    %v2069 = vand.u32 %v2068, 4294901760
    %v2070 = vsub.f32 %v2068, %v2069
    %v2071 = vand.u32 %v2070, 4294901760
    %2072 = vmatpush.msra.mxu0 %v2071
    %v2073 = vand.u32 %v1331, 4294901760
    %v2074 = vsub.f32 %v1331, %v2073
    %v2075 = vand.u32 %v2074, 4294901760
    %v2076 = vsub.f32 %v2074, %v2075
    %v2077 = vand.u32 %v2076, 4294901760
    %2078 = vmatpush.msra.mxu0 %v2077
    %v2079 = vand.u32 %v1328, 4294901760
    %v2080 = vsub.f32 %v1328, %v2079
    %v2081 = vand.u32 %v2080, 4294901760
    %v2082 = vsub.f32 %v2080, %v2081
    %v2083 = vand.u32 %v2082, 4294901760
    %2084 = vmatpush.msra.mxu0 %v2083
    %v2085 = vand.u32 %v1325, 4294901760
    %v2086 = vsub.f32 %v1325, %v2085
    %v2087 = vand.u32 %v2086, 4294901760
    %v2088 = vsub.f32 %v2086, %v2087
    %v2089 = vand.u32 %v2088, 4294901760
    %2090 = vmatpush.msra.mxu0 %v2089
    %v2091 = vand.u32 %v1322, 4294901760
    %v2092 = vsub.f32 %v1322, %v2091
    %v2093 = vand.u32 %v2092, 4294901760
    %v2094 = vsub.f32 %v2092, %v2093
    %v2095 = vand.u32 %v2094, 4294901760
    %2096 = vmatpush.msra.mxu0 %v2095
    %v2097 = vand.u32 %v1319, 4294901760
    %v2098 = vsub.f32 %v1319, %v2097
    %v2099 = vand.u32 %v2098, 4294901760
    %v2100 = vsub.f32 %v2098, %v2099
    %v2101 = vand.u32 %v2100, 4294901760
    %2102 = vmatpush.msra.mxu0 %v2101
    %v2103 = vand.u32 %v1316, 4294901760
    %v2104 = vsub.f32 %v1316, %v2103
    %v2105 = vand.u32 %v2104, 4294901760
    %v2106 = vsub.f32 %v2104, %v2105
    %v2107 = vand.u32 %v2106, 4294901760
    %2108 = vmatpush.msra.mxu0 %v2107
    %v2109 = vand.u32 %v1313, 4294901760
    %v2110 = vsub.f32 %v1313, %v2109
    %v2111 = vand.u32 %v2110, 4294901760
    %v2112 = vsub.f32 %v2110, %v2111
    %v2113 = vand.u32 %v2112, 4294901760
    %2114 = vmatpush.msra.mxu0 %v2113
    %v2115 = vand.u32 %v1310, 4294901760
    %v2116 = vsub.f32 %v1310, %v2115
    %v2117 = vand.u32 %v2116, 4294901760
    %v2118 = vsub.f32 %v2116, %v2117
    %v2119 = vand.u32 %v2118, 4294901760
    %2120 = vmatpush.msra.mxu0 %v2119
    %v2121 = vand.u32 %v1307, 4294901760
    %v2122 = vsub.f32 %v1307, %v2121
    %v2123 = vand.u32 %v2122, 4294901760
    %v2124 = vsub.f32 %v2122, %v2123
    %v2125 = vand.u32 %v2124, 4294901760
    %2126 = vmatpush.msra.mxu0 %v2125
    %v2127 = vand.u32 %v1304, 4294901760
    %v2128 = vsub.f32 %v1304, %v2127
    %v2129 = vand.u32 %v2128, 4294901760
    %v2130 = vsub.f32 %v2128, %v2129
    %v2131 = vand.u32 %v2130, 4294901760
    %2132 = vmatpush.msra.mxu0 %v2131
    %v2133 = vand.u32 %v1301, 4294901760
    %v2134 = vsub.f32 %v1301, %v2133
    %v2135 = vand.u32 %v2134, 4294901760
    %v2136 = vsub.f32 %v2134, %v2135
    %v2137 = vand.u32 %v2136, 4294901760
    %2138 = vmatpush.msra.mxu0 %v2137
    %v2139 = vand.u32 %v1298, 4294901760
    %v2140 = vsub.f32 %v1298, %v2139
    %v2141 = vand.u32 %v2140, 4294901760
    %v2142 = vsub.f32 %v2140, %v2141
    %v2143 = vand.u32 %v2142, 4294901760
    %2144 = vmatpush.msra.mxu0 %v2143
    %v2145 = vand.u32 %v1295, 4294901760
    %v2146 = vsub.f32 %v1295, %v2145
    %v2147 = vand.u32 %v2146, 4294901760
    %v2148 = vsub.f32 %v2146, %v2147
    %v2149 = vand.u32 %v2148, 4294901760
    %2150 = vmatpush.msra.mxu0 %v2149
    %v2151 = vand.u32 %v1292, 4294901760
    %v2152 = vsub.f32 %v1292, %v2151
    %v2153 = vand.u32 %v2152, 4294901760
    %v2154 = vsub.f32 %v2152, %v2153
    %v2155 = vand.u32 %v2154, 4294901760
    %2156 = vmatpush.msra.mxu0 %v2155
    %v2157 = vand.u32 %v1289, 4294901760
    %v2158 = vsub.f32 %v1289, %v2157
    %v2159 = vand.u32 %v2158, 4294901760
    %v2160 = vsub.f32 %v2158, %v2159
    %v2161 = vand.u32 %v2160, 4294901760
    %2162 = vmatpush.msra.mxu0 %v2161
    %v2163 = vand.u32 %v1286, 4294901760
    %2164 = vmatmul.f32.gmra.mxu0 %v2163
    %v2165 = vpop.f32.mrf.mxu0
    %v2166 = vadd.f32 %v2065, %v2165
    %2167 = vdwg.mxu0
    %v2168 = vand.u32 %v1334, 4294901760
    %v2169 = vsub.f32 %v1334, %v2168
    %2170 = vmatpush.msra.mxu0 %v2169
    %v2171 = vand.u32 %v1331, 4294901760
    %v2172 = vsub.f32 %v1331, %v2171
    %2173 = vmatpush.msra.mxu0 %v2172
    %v2174 = vand.u32 %v1328, 4294901760
    %v2175 = vsub.f32 %v1328, %v2174
    %2176 = vmatpush.msra.mxu0 %v2175
    %v2177 = vand.u32 %v1325, 4294901760
    %v2178 = vsub.f32 %v1325, %v2177
    %2179 = vmatpush.msra.mxu0 %v2178
    %v2180 = vand.u32 %v1322, 4294901760
    %v2181 = vsub.f32 %v1322, %v2180
    %2182 = vmatpush.msra.mxu0 %v2181
    %v2183 = vand.u32 %v1319, 4294901760
    %v2184 = vsub.f32 %v1319, %v2183
    %2185 = vmatpush.msra.mxu0 %v2184
    %v2186 = vand.u32 %v1316, 4294901760
    %v2187 = vsub.f32 %v1316, %v2186
    %2188 = vmatpush.msra.mxu0 %v2187
    %v2189 = vand.u32 %v1313, 4294901760
    %v2190 = vsub.f32 %v1313, %v2189
    %2191 = vmatpush.msra.mxu0 %v2190
    %v2192 = vand.u32 %v1310, 4294901760
    %v2193 = vsub.f32 %v1310, %v2192
    %2194 = vmatpush.msra.mxu0 %v2193
    %v2195 = vand.u32 %v1307, 4294901760
    %v2196 = vsub.f32 %v1307, %v2195
    %2197 = vmatpush.msra.mxu0 %v2196
    %v2198 = vand.u32 %v1304, 4294901760
    %v2199 = vsub.f32 %v1304, %v2198
    %2200 = vmatpush.msra.mxu0 %v2199
    %v2201 = vand.u32 %v1301, 4294901760
    %v2202 = vsub.f32 %v1301, %v2201
    %2203 = vmatpush.msra.mxu0 %v2202
    %v2204 = vand.u32 %v1298, 4294901760
    %v2205 = vsub.f32 %v1298, %v2204
    %2206 = vmatpush.msra.mxu0 %v2205
    %v2207 = vand.u32 %v1295, 4294901760
    %v2208 = vsub.f32 %v1295, %v2207
    %2209 = vmatpush.msra.mxu0 %v2208
    %v2210 = vand.u32 %v1292, 4294901760
    %v2211 = vsub.f32 %v1292, %v2210
    %2212 = vmatpush.msra.mxu0 %v2211
    %v2213 = vand.u32 %v1289, 4294901760
    %v2214 = vsub.f32 %v1289, %v2213
    %2215 = vmatpush.msra.mxu0 %v2214
    %v2216 = vand.u32 %v1286, 4294901760
    %v2217 = vsub.f32 %v1286, %v2216
    %2218 = vmatmul.f32.gmra.mxu0 %v2217
    %v2219 = vpop.f32.mrf.mxu0
    %v2220 = vadd.f32 %v2166, %v2219
    %2221 = vdwg.mxu0
    %v2222 = vand.u32 %v1334, 4294901760
    %2223 = vmatpush.msra.mxu0 %v2222
    %v2224 = vand.u32 %v1331, 4294901760
    %2225 = vmatpush.msra.mxu0 %v2224
    %v2226 = vand.u32 %v1328, 4294901760
    %2227 = vmatpush.msra.mxu0 %v2226
    %v2228 = vand.u32 %v1325, 4294901760
    %2229 = vmatpush.msra.mxu0 %v2228
    %v2230 = vand.u32 %v1322, 4294901760
    %2231 = vmatpush.msra.mxu0 %v2230
    %v2232 = vand.u32 %v1319, 4294901760
    %2233 = vmatpush.msra.mxu0 %v2232
    %v2234 = vand.u32 %v1316, 4294901760
    %2235 = vmatpush.msra.mxu0 %v2234
    %v2236 = vand.u32 %v1313, 4294901760
    %2237 = vmatpush.msra.mxu0 %v2236
    %v2238 = vand.u32 %v1310, 4294901760
    %2239 = vmatpush.msra.mxu0 %v2238
    %v2240 = vand.u32 %v1307, 4294901760
    %2241 = vmatpush.msra.mxu0 %v2240
    %v2242 = vand.u32 %v1304, 4294901760
    %2243 = vmatpush.msra.mxu0 %v2242
    %v2244 = vand.u32 %v1301, 4294901760
    %2245 = vmatpush.msra.mxu0 %v2244
    %v2246 = vand.u32 %v1298, 4294901760
    %2247 = vmatpush.msra.mxu0 %v2246
    %v2248 = vand.u32 %v1295, 4294901760
    %2249 = vmatpush.msra.mxu0 %v2248
    %v2250 = vand.u32 %v1292, 4294901760
    %2251 = vmatpush.msra.mxu0 %v2250
    %v2252 = vand.u32 %v1289, 4294901760
    %2253 = vmatpush.msra.mxu0 %v2252
    %v2254 = vand.u32 %v1286, 4294901760
    %v2255 = vsub.f32 %v1286, %v2254
    %v2256 = vand.u32 %v2255, 4294901760
    %2257 = vmatmul.f32.gmra.mxu0 %v2256
    %v2258 = vpop.f32.mrf.mxu0
    %v2259 = vadd.f32 %v2220, %v2258
    %2260 = vdwg.mxu0
    %v2261 = vand.u32 %v1334, 4294901760
    %v2262 = vsub.f32 %v1334, %v2261
    %v2263 = vand.u32 %v2262, 4294901760
    %2264 = vmatpush.msra.mxu0 %v2263
    %v2265 = vand.u32 %v1331, 4294901760
    %v2266 = vsub.f32 %v1331, %v2265
    %v2267 = vand.u32 %v2266, 4294901760
    %2268 = vmatpush.msra.mxu0 %v2267
    %v2269 = vand.u32 %v1328, 4294901760
    %v2270 = vsub.f32 %v1328, %v2269
    %v2271 = vand.u32 %v2270, 4294901760
    %2272 = vmatpush.msra.mxu0 %v2271
    %v2273 = vand.u32 %v1325, 4294901760
    %v2274 = vsub.f32 %v1325, %v2273
    %v2275 = vand.u32 %v2274, 4294901760
    %2276 = vmatpush.msra.mxu0 %v2275
    %v2277 = vand.u32 %v1322, 4294901760
    %v2278 = vsub.f32 %v1322, %v2277
    %v2279 = vand.u32 %v2278, 4294901760
    %2280 = vmatpush.msra.mxu0 %v2279
    %v2281 = vand.u32 %v1319, 4294901760
    %v2282 = vsub.f32 %v1319, %v2281
    %v2283 = vand.u32 %v2282, 4294901760
    %2284 = vmatpush.msra.mxu0 %v2283
    %v2285 = vand.u32 %v1316, 4294901760
    %v2286 = vsub.f32 %v1316, %v2285
    %v2287 = vand.u32 %v2286, 4294901760
    %2288 = vmatpush.msra.mxu0 %v2287
    %v2289 = vand.u32 %v1313, 4294901760
    %v2290 = vsub.f32 %v1313, %v2289
    %v2291 = vand.u32 %v2290, 4294901760
    %2292 = vmatpush.msra.mxu0 %v2291
    %v2293 = vand.u32 %v1310, 4294901760
    %v2294 = vsub.f32 %v1310, %v2293
    %v2295 = vand.u32 %v2294, 4294901760
    %2296 = vmatpush.msra.mxu0 %v2295
    %v2297 = vand.u32 %v1307, 4294901760
    %v2298 = vsub.f32 %v1307, %v2297
    %v2299 = vand.u32 %v2298, 4294901760
    %2300 = vmatpush.msra.mxu0 %v2299
    %v2301 = vand.u32 %v1304, 4294901760
    %v2302 = vsub.f32 %v1304, %v2301
    %v2303 = vand.u32 %v2302, 4294901760
    %2304 = vmatpush.msra.mxu0 %v2303
    %v2305 = vand.u32 %v1301, 4294901760
    %v2306 = vsub.f32 %v1301, %v2305
    %v2307 = vand.u32 %v2306, 4294901760
    %2308 = vmatpush.msra.mxu0 %v2307
    %v2309 = vand.u32 %v1298, 4294901760
    %v2310 = vsub.f32 %v1298, %v2309
    %v2311 = vand.u32 %v2310, 4294901760
    %2312 = vmatpush.msra.mxu0 %v2311
    %v2313 = vand.u32 %v1295, 4294901760
    %v2314 = vsub.f32 %v1295, %v2313
    %v2315 = vand.u32 %v2314, 4294901760
    %2316 = vmatpush.msra.mxu0 %v2315
    %v2317 = vand.u32 %v1292, 4294901760
    %v2318 = vsub.f32 %v1292, %v2317
    %v2319 = vand.u32 %v2318, 4294901760
    %2320 = vmatpush.msra.mxu0 %v2319
    %v2321 = vand.u32 %v1289, 4294901760
    %v2322 = vsub.f32 %v1289, %v2321
    %v2323 = vand.u32 %v2322, 4294901760
    %2324 = vmatpush.msra.mxu0 %v2323
    %v2325 = vand.u32 %v1286, 4294901760
    %2326 = vmatmul.f32.gmra.mxu0 %v2325
    %v2327 = vpop.f32.mrf.mxu0
    %v2328 = vadd.f32 %v2259, %v2327
    %2329 = vdwg.mxu0
    %v2330 = vand.u32 %v1334, 4294901760
    %2331 = vmatpush.msra.mxu0 %v2330
    %v2332 = vand.u32 %v1331, 4294901760
    %2333 = vmatpush.msra.mxu0 %v2332
    %v2334 = vand.u32 %v1328, 4294901760
    %2335 = vmatpush.msra.mxu0 %v2334
    %v2336 = vand.u32 %v1325, 4294901760
    %2337 = vmatpush.msra.mxu0 %v2336
    %v2338 = vand.u32 %v1322, 4294901760
    %2339 = vmatpush.msra.mxu0 %v2338
    %v2340 = vand.u32 %v1319, 4294901760
    %2341 = vmatpush.msra.mxu0 %v2340
    %v2342 = vand.u32 %v1316, 4294901760
    %2343 = vmatpush.msra.mxu0 %v2342
    %v2344 = vand.u32 %v1313, 4294901760
    %2345 = vmatpush.msra.mxu0 %v2344
    %v2346 = vand.u32 %v1310, 4294901760
    %2347 = vmatpush.msra.mxu0 %v2346
    %v2348 = vand.u32 %v1307, 4294901760
    %2349 = vmatpush.msra.mxu0 %v2348
    %v2350 = vand.u32 %v1304, 4294901760
    %2351 = vmatpush.msra.mxu0 %v2350
    %v2352 = vand.u32 %v1301, 4294901760
    %2353 = vmatpush.msra.mxu0 %v2352
    %v2354 = vand.u32 %v1298, 4294901760
    %2355 = vmatpush.msra.mxu0 %v2354
    %v2356 = vand.u32 %v1295, 4294901760
    %2357 = vmatpush.msra.mxu0 %v2356
    %v2358 = vand.u32 %v1292, 4294901760
    %2359 = vmatpush.msra.mxu0 %v2358
    %v2360 = vand.u32 %v1289, 4294901760
    %2361 = vmatpush.msra.mxu0 %v2360
    %v2362 = vand.u32 %v1286, 4294901760
    %2363 = vmatmul.f32.gmra.mxu0 %v2362
    %v2364 = vpop.f32.mrf.mxu0
    %v2365 = vadd.f32 %v2328, %v2364
    %2366 = vdwg.mxu0
    %v2367 = vxor.u32 %v1683, 2147483648
    %v2368 = vxor.u32 %v2024, 2147483648
    %v2369 = vxor.u32 %v2365, 2147483648
    %v2370 = vmul.f32 %v2367, 1.442695
    %v2371 = vpow.pop %v2370
    %v2372 = vmul.f32 %v2368, 1.442695
    %v2373 = vpow.pop %v2372
    %v2374 = vmul.f32 %v2369, 1.442695
    %v2375 = vpow.pop %v2374
    %v2376 = vadd.f32 %v2371, 1.0
    %v2377 = vadd.f32 %v2373, 1.0
    %v2378 = vadd.f32 %v2375, 1.0
    %v2379 = vrcp.pop %v2376
    %v2380 = vmul.f32 %v2376, %v2379
    %v2381 = vsub.f32 1.0, %v2380
    %v2382 = vmul.f32 %v2379, %v2381
    %v2383 = vadd.f32 %v2379, %v2382
    %vm2384 = vweird.f32 %v2376
    %vm2385 = vweird.f32 %v2379
    %vm2386 = vmor %vm2384, %vm2385
    %v2387 = vsel %vm2386, %v2379, %v2383
    %v2388 = vand.u32 2147483647, %v2376
    %vm2389 = vcmp.eq.f32.partialorder %v2388, 8.507059e+37
    %v2390 = vand.u32 %v2376, 2147483648
    %v2391 = vor.u32 1.1754944e-38, %v2390
    %v2392 = vsel %vm2389, %v2391, %v2387
    %v2393 = vmul.f32 1.0, %v2392
    %v2394 = vrcp.pop %v2377
    %v2395 = vmul.f32 %v2377, %v2394
    %v2396 = vsub.f32 1.0, %v2395
    %v2397 = vmul.f32 %v2394, %v2396
    %v2398 = vadd.f32 %v2394, %v2397
    %vm2399 = vweird.f32 %v2377
    %vm2400 = vweird.f32 %v2394
    %vm2401 = vmor %vm2399, %vm2400
    %v2402 = vsel %vm2401, %v2394, %v2398
    %v2403 = vand.u32 2147483647, %v2377
    %vm2404 = vcmp.eq.f32.partialorder %v2403, 8.507059e+37
    %v2405 = vand.u32 %v2377, 2147483648
    %v2406 = vor.u32 1.1754944e-38, %v2405
    %v2407 = vsel %vm2404, %v2406, %v2402
    %v2408 = vmul.f32 1.0, %v2407
    %v2409 = vrcp.pop %v2378
    %v2410 = vmul.f32 %v2378, %v2409
    %v2411 = vsub.f32 1.0, %v2410
    %v2412 = vmul.f32 %v2409, %v2411
    %v2413 = vadd.f32 %v2409, %v2412
    %vm2414 = vweird.f32 %v2378
    %vm2415 = vweird.f32 %v2409
    %vm2416 = vmor %vm2414, %vm2415
    %v2417 = vsel %vm2416, %v2409, %v2413
    %v2418 = vand.u32 2147483647, %v2378
    %vm2419 = vcmp.eq.f32.partialorder %v2418, 8.507059e+37
    %v2420 = vand.u32 %v2378, 2147483648
    %v2421 = vor.u32 1.1754944e-38, %v2420
    %v2422 = vsel %vm2419, %v2421, %v2417
    %v2423 = vmul.f32 1.0, %v2422
    %2424 = vst [vmem:[#allocation7] sm:$0xff] %v2393
    %2425 = vst [vmem:[#allocation7 + $0x8] sm:$0xff] %v2408
    %2426 = vst [vmem:[#allocation7 + $0x10] sm:$0xff] %v2423
    // Predicated region
    $region22: #{decoder_forward.1} parent=1 // pred_check
      _
    $region23: #{decoder_forward.1} parent=1 // pred_check_branch
      %2428 = sbr.rel (0) target = $region25
    $region24: #{decoder_forward.1} parent=1 // pred_region
      %2430 = vsyncadd [#allocation4], 0
      %s2432 = sshll.u32 [#allocation7], 4
      %s2433 = int_to_ptr.vmem [resolvable:$true] %s2432
      %s2434 = sshll.u32 %s3, 4
      %s2435 = int_to_ptr.hbm [resolvable:$true] %s2434
      %2437 = dma.vmem_to_hbm [thread:$0]  %s2433, 384, %s2435, [#allocation4]
    $region25: #{decoder_forward.1} parent=1 // pred_fallthru
      _
    // Predicated region
    $region26: #{decoder_forward.1} parent=1 // pred_check
      _
    $region27: #{decoder_forward.1} parent=1 // pred_check_branch
      %2439 = sbr.rel (0) target = $region29
    $region28: #{decoder_forward.1} parent=1 // pred_region
      %2441 = dma.done [#allocation4], 384
    $region29: #{decoder_forward.1} parent=1 // pred_fallthru
      _
    %2442 = vsyncpa [#allocation3], 1
    %2443 = vsyncpa [#allocation6], 1
    %2444 = vsyncpa [#allocation4], 1

</llo_original>
